<compile_context>
chip_gen: v5e
topology: v5e:2x2
jax: 0.10.0
libtpu: 0.0.40
codegen_flags: <defaults>
</compile_context>

<pallas_src>
import functools

import jax
import jax.numpy as jnp
import numpy as np
from jax import lax
from jax.experimental import pallas as pl
from jax.experimental.pallas import tpu as pltpu

CELU_ALPHA = 0.3  # stand-in for config['Misc']['CELU_alpha']
BN_EPS = 1e-5


# ----------------------------------------------------------------------------
# Weight preprocessing (tiny, done once in the wrapper):
#   band matrices fold the 3x3 taps + x-padding of a "SAME" conv into three
#   (W*Cin, W*Cout) block-banded matrices, one per y-tap, so the conv becomes
#   out[h, :] = sum_dy xpad_y[h+dy, :] @ M[dy]  in the lane-packed layout.
# ----------------------------------------------------------------------------
def make_band_matrices(w_hwio, W, dtype=jnp.bfloat16):
    """w_hwio: (3, 3, Cin, Cout) -> (3, W*Cin, W*Cout) banded weight matrices.
    Stored bf16: the MXU operands are bf16 (f32 accumulation)."""
    _, _, cin, cout = w_hwio.shape
    mats = []
    for dy in range(3):
        m = jnp.zeros((W * cin, W * cout), jnp.float32)
        for dx in range(3):
            src = np.arange(W) + dx - 1          # input column feeding output col w
            valid = (src >= 0) & (src < W)       # x-direction zero padding
            sel = np.zeros((W, W), np.float32)
            sel[src[valid], np.arange(W)[valid]] = 1.0
            m = m + jnp.kron(jnp.asarray(sel), w_hwio[dy, dx].astype(jnp.float32))
        mats.append(m)
    return jnp.stack(mats, axis=0).astype(dtype)


def pack_channels(v, W):
    """Per-channel vector (C,) -> lane-packed (1, W*C) matching the (w, c) order."""
    return jnp.tile(v.astype(jnp.float32), W).reshape(1, -1)


def make_group_matrix(W, C):
    """(W*C, W*C) 0/1 matrix: entry (i, j) is 1 iff channel(i) == channel(j).
    A (1, W*C) @ G matmul turns per-(w,c) sums into per-channel totals already
    replicated across the W lane groups.  Kept f32 (stats precision)."""
    return jnp.asarray(np.kron(np.ones((W, W), np.float32), np.eye(C, dtype=np.float32)))


# ----------------------------------------------------------------------------
# In-kernel helpers (traced Python, no pallas_call of their own).
# ----------------------------------------------------------------------------
def _conv_banded(xsrc_fn, pad_ref, band_ref, bias_row, dst_ref, n_imgs, H):
    """3x3 SAME conv in the lane-packed (h, w*c) layout, one image at a time.

    xsrc_fn(lo) returns image rows [lo, lo+H) as an f32 (H, L_in) array.
    pad_ref is an f32 (H+2, L_in) scratch whose halo rows 0 and H+1 are zero.
    MXU operands are cast to bf16; accumulation is f32.
    """
    for n in range(n_imgs):
        lo = n * H
        pad_ref[1:H + 1, :] = xsrc_fn(lo)
        acc = jnp.dot(pad_ref[1:H + 1, :].astype(jnp.bfloat16), band_ref[1],
                      preferred_element_type=jnp.float32)
        acc = acc + jnp.dot(pad_ref[0:H, :].astype(jnp.bfloat16), band_ref[0],
                            preferred_element_type=jnp.float32)
        acc = acc + jnp.dot(pad_ref[2:H + 2, :].astype(jnp.bfloat16), band_ref[2],
                            preferred_element_type=jnp.float32)
        dst_ref[lo:lo + H, :] = (acc + bias_row).astype(dst_ref.dtype)


def _bn_scale_shift(y, gsel_ref, gamma_row, beta_row, inv_count, eps):
    """Per-channel (lane-packed) BN scale/shift from batch statistics of y."""
    s = jnp.dot(jnp.sum(y, axis=0, keepdims=True), gsel_ref[...],
                preferred_element_type=jnp.float32)
    sq = jnp.dot(jnp.sum(y * y, axis=0, keepdims=True), gsel_ref[...],
                 preferred_element_type=jnp.float32)
    mean = s * inv_count
    var = sq * inv_count - mean * mean            # biased variance (training fwd)
    scale = gamma_row * lax.rsqrt(var + eps)
    shift = beta_row - mean * scale
    return scale, shift


# ----------------------------------------------------------------------------
# Kernel A: conv0 only (batch_norm=False path).  Whole batch in one program.
# ----------------------------------------------------------------------------
def _conv_only_kernel(x_ref, band0_ref, b0_ref, out_ref, xpad,
                      *, n_imgs, rows_per_img):
    H = rows_per_img
    xpad[...] = jnp.zeros_like(xpad)   # zero once; halo rows stay zero
    _conv_banded(lambda lo: x_ref[lo:lo + H, :].astype(jnp.float32),
                 xpad, band0_ref, b0_ref[...], out_ref, n_imgs, H)


# ----------------------------------------------------------------------------
# Kernel B: fully fused conv0 -> bn0 -> CELU -> conv1 -> bn1 (batch_norm=True).
# y0 / y1 / the activation never leave VMEM; only the final output hits HBM.
# ----------------------------------------------------------------------------
def _fused_bn_kernel(x_ref, band0_ref, b0_ref, g0_ref, be0_ref,
                     band1_ref, b1_ref, g1_ref, be1_ref, gsel_ref,
                     out_ref, xpad, apad, y0_ref, y1_ref,
                     *, n_imgs, rows_per_img, count, eps, alpha):
    H = rows_per_img
    inv_count = 1.0 / count

    # Zero the pad scratches exactly once; only rows 1..H are rewritten per
    # image, so the y-halo rows 0 and H+1 stay zero for every image.
    xpad[...] = jnp.zeros_like(xpad)
    apad[...] = jnp.zeros_like(apad)

    # conv0 over the whole batch -> y0 (VMEM resident)
    _conv_banded(lambda lo: x_ref[lo:lo + H, :].astype(jnp.float32),
                 xpad, band0_ref, b0_ref[...], y0_ref, n_imgs, H)

    # bn0 (batch statistics, biased variance) + CELU -- finalized once.
    y0 = y0_ref[...]
    scale0, shift0 = _bn_scale_shift(y0, gsel_ref, g0_ref[...], be0_ref[...],
                                     inv_count, eps)
    a = y0 * scale0 + shift0
    a = jnp.maximum(a, 0.0) + jnp.minimum(
        0.0, alpha * (jnp.exp(a * (1.0 / alpha)) - 1.0))

    # conv1 on the activated slab -> y1 (VMEM resident)
    _conv_banded(lambda lo: a[lo:lo + H, :], apad, band1_ref, b1_ref[...],
                 y1_ref, n_imgs, H)

    # bn1 normalize -> final output (the only HBM write of the pipeline)
    y1 = y1_ref[...]
    scale1, shift1 = _bn_scale_shift(y1, gsel_ref, g1_ref[...], be1_ref[...],
                                     inv_count, eps)
    out_ref[...] = (y1 * scale1 + shift1).astype(out_ref.dtype)


# ----------------------------------------------------------------------------
# pallas_call wrappers.
# ----------------------------------------------------------------------------
def _full2d(rows, cols):
    return pl.BlockSpec((rows, cols), lambda i: (0, 0))


def conv_only_call(x2d, band0, bias0, *, n_imgs, rows_per_img, out_dtype):
    NH, Lin = x2d.shape
    L = bias0.shape[-1]
    kern = functools.partial(_conv_only_kernel, n_imgs=n_imgs,
                             rows_per_img=rows_per_img)
    return pl.pallas_call(
        kern,
        out_shape=jax.ShapeDtypeStruct((NH, L), out_dtype),
        grid_spec=pltpu.PrefetchScalarGridSpec(
            num_scalar_prefetch=0,
            grid=(1,),
            in_specs=[
                _full2d(NH, Lin),
                pl.BlockSpec((3, Lin, L), lambda i: (0, 0, 0)),
                _full2d(1, L),
            ],
            out_specs=_full2d(NH, L),
            scratch_shapes=[pltpu.VMEM((rows_per_img + 2, Lin), jnp.float32)],
        ),
        compiler_params=pltpu.CompilerParams(
            dimension_semantics=("arbitrary",),
            vmem_limit_bytes=32 * 1024 * 1024),
    )(x2d, band0, bias0)


def fused_bn_call(x2d, band0, bias0, g0, be0, band1, bias1, g1, be1, gsel,
                  *, n_imgs, rows_per_img, count, eps, alpha, out_dtype):
    NH, Lin = x2d.shape
    L = bias1.shape[-1]
    kern = functools.partial(_fused_bn_kernel, n_imgs=n_imgs,
                             rows_per_img=rows_per_img, count=float(count),
                             eps=eps, alpha=alpha)
    return pl.pallas_call(
        kern,
        out_shape=jax.ShapeDtypeStruct((NH, L), out_dtype),
        grid_spec=pltpu.PrefetchScalarGridSpec(
            num_scalar_prefetch=0,
            grid=(1,),
            in_specs=[
                _full2d(NH, Lin),                               # x (lane-packed)
                pl.BlockSpec((3, Lin, L), lambda i: (0, 0, 0)),  # band0 (bf16)
                _full2d(1, L),                                   # bias0
                _full2d(1, L),                                   # gamma0
                _full2d(1, L),                                   # beta0
                pl.BlockSpec((3, L, L), lambda i: (0, 0, 0)),    # band1 (bf16)
                _full2d(1, L),                                   # bias1
                _full2d(1, L),                                   # gamma1
                _full2d(1, L),                                   # beta1
                _full2d(L, L),                                   # G (channel select)
            ],
            out_specs=_full2d(NH, L),
            scratch_shapes=[
                pltpu.VMEM((rows_per_img + 2, Lin), jnp.float32),  # xpad
                pltpu.VMEM((rows_per_img + 2, L), jnp.float32),    # apad
                pltpu.VMEM((NH, L), jnp.float32),                  # y0
                pltpu.VMEM((NH, L), jnp.float32),                  # y1
            ],
        ),
        compiler_params=pltpu.CompilerParams(
            dimension_semantics=("arbitrary",),
            vmem_limit_bytes=32 * 1024 * 1024),
    )(x2d, band0, bias0, g0, be0, band1, bias1, g1, be1, gsel)


# ----------------------------------------------------------------------------
# mapping_block forward (wrapper over the Pallas kernels).
# Params store conv weights in HWIO (3, 3, Cin, Cout).
# ----------------------------------------------------------------------------
def mapping_block_forward(x_nchw, params, *, batch_norm):
    N, Cin, H, W = x_nchw.shape
    Cout = params["b0"].shape[0]
    dtype = x_nchw.dtype

    # NCHW -> lane-packed (N*H, W*Cin). Layout plumbing only.
    # TODO(synk): for large activations fold this transpose into kernel-side
    # index math instead of a wrapper-side XLA transpose.
    x2d = jnp.transpose(x_nchw, (0, 2, 3, 1)).reshape(N * H, W * Cin)

    band0 = make_band_matrices(params["w0"], W)      # bf16 MXU operand
    bias0_p = pack_channels(params["b0"], W)

    if not batch_norm:
        y = conv_only_call(x2d, band0, bias0_p, n_imgs=N, rows_per_img=H,
                           out_dtype=dtype)
        return jnp.transpose(y.reshape(N, H, W, Cout), (0, 3, 1, 2))

    band1 = make_band_matrices(params["w1"], W)
    bias1_p = pack_channels(params["b1"], W)
    gsel = make_group_matrix(W, Cout)
    g0_p, be0_p = pack_channels(params["g0"], W), pack_channels(params["be0"], W)
    g1_p, be1_p = pack_channels(params["g1"], W), pack_channels(params["be1"], W)

    # TODO(synk): the fused kernel holds the whole batch in VMEM; for large
    # N*H*W*C tile the batch over a grid (partial BN stats like the previous
    # multi-call version) so both v7x TensorCores are fed.
    out = fused_bn_call(x2d, band0, bias0_p, g0_p, be0_p, band1, bias1_p,
                        g1_p, be1_p, gsel, n_imgs=N, rows_per_img=H,
                        count=N * H * W, eps=BN_EPS, alpha=CELU_ALPHA,
                        out_dtype=dtype)
    return jnp.transpose(out.reshape(N, H, W, Cout), (0, 3, 1, 2))


# ----------------------------------------------------------------------------
# Pure-JAX reference (correctness check only).
# ----------------------------------------------------------------------------
def _ref_conv(x_nhwc, w_hwio, bias):
    y = lax.conv_general_dilated(x_nhwc, w_hwio, (1, 1), "SAME",
                                 dimension_numbers=("NHWC", "HWIO", "NHWC"),
                                 precision=lax.Precision.HIGHEST)
    return y + bias


def _ref_bn_act(x, g, b, use_celu):
    mean = jnp.mean(x, axis=(0, 1, 2), keepdims=True)
    var = jnp.mean((x - mean) ** 2, axis=(0, 1, 2), keepdims=True)
    y = (x - mean) * lax.rsqrt(var + BN_EPS) * g + b
    if use_celu:
        y = jnp.maximum(y, 0.0) + jnp.minimum(
            0.0, CELU_ALPHA * (jnp.exp(y / CELU_ALPHA) - 1.0))
    return y


def _ref_forward(x_nchw, p, batch_norm):
    x = jnp.transpose(x_nchw, (0, 2, 3, 1))
    if batch_norm:
        out = _ref_conv(x, p["w0"], p["b0"])
        out = _ref_bn_act(out, p["g0"], p["be0"], True)
        out = _ref_conv(out, p["w1"], p["b1"])
        out = _ref_bn_act(out, p["g1"], p["be1"], False)
    else:
        out = _ref_conv(x, p["w0"], p["b0"])
    return jnp.transpose(out, (0, 3, 1, 2))


def init_params(key, c_in, c_out):
    k0, k1, k2, k3 = jax.random.split(key, 4)
    # PyTorch conv weight layout (Cout, Cin, 3, 3) -> HWIO (3, 3, Cin, Cout)
    w0 = 0.1 * jax.random.normal(k0, (c_out, c_in, 3, 3), jnp.float32)
    w1 = 0.1 * jax.random.normal(k1, (c_out, c_out, 3, 3), jnp.float32)
    b0 = 0.05 * jax.random.normal(k2, (c_out,), jnp.float32)
    b1 = 0.05 * jax.random.normal(k3, (c_out,), jnp.float32)
    to_hwio = lambda w: jnp.transpose(w, (2, 3, 1, 0))
    return {
        "w0": to_hwio(w0), "b0": b0,
        "w1": to_hwio(w1), "b1": b1,
        # BatchNorm2d default init: weight=1, bias=0
        "g0": jnp.ones((c_out,), jnp.float32), "be0": jnp.zeros((c_out,), jnp.float32),
        "g1": jnp.ones((c_out,), jnp.float32), "be1": jnp.zeros((c_out,), jnp.float32),
    }


if __name__ == "__main__":
    key = jax.random.PRNGKey(0)
    kx, kp = jax.random.split(key)
    N, C_IN, C_OUT, H, W = 2, 4, 8, 16, 16

    x = jax.random.normal(kx, (N, C_IN, H, W), jnp.float32)  # NCHW like PyTorch
    params = init_params(kp, C_IN, C_OUT)

    fwd_bn = jax.jit(lambda xx, pp: mapping_block_forward(xx, pp, batch_norm=True))
    fwd_plain = jax.jit(lambda xx, pp: mapping_block_forward(xx, pp, batch_norm=False))

    # Tolerances reflect bf16 MXU operands (f32 accumulation) vs the f32
    # HIGHEST-precision reference.
    # batch_norm=True path (conv -> bn -> CELU -> conv -> bn)
    out_bn = jax.block_until_ready(fwd_bn(x, params))
    ref_bn = _ref_forward(x, params, True)
    np.testing.assert_allclose(np.asarray(out_bn), np.asarray(ref_bn),
                               rtol=2e-2, atol=2e-2)

    # batch_norm=False path (just conv0)
    out_plain = jax.block_until_ready(fwd_plain(x, params))
    ref_plain = _ref_forward(x, params, False)
    np.testing.assert_allclose(np.asarray(out_plain), np.asarray(ref_plain),
                               rtol=2e-2, atol=2e-2)

    print("KERNEL_OK")
</pallas_src>

<mosaic_0001>
module attributes {stable_mosaic.version = 11 : i64} {
  func.func @_fused_bn_kernel(%arg0: i32, %arg1: memref<32x64xf32, #tpu.memory_space<vmem>>, %arg2: memref<3x64x128xbf16, #tpu.memory_space<vmem>>, %arg3: memref<1x128xf32, #tpu.memory_space<vmem>>, %arg4: memref<1x128xf32, #tpu.memory_space<vmem>>, %arg5: memref<1x128xf32, #tpu.memory_space<vmem>>, %arg6: memref<3x128x128xbf16, #tpu.memory_space<vmem>>, %arg7: memref<1x128xf32, #tpu.memory_space<vmem>>, %arg8: memref<1x128xf32, #tpu.memory_space<vmem>>, %arg9: memref<1x128xf32, #tpu.memory_space<vmem>>, %arg10: memref<128x128xf32, #tpu.memory_space<vmem>>, %arg11: memref<32x128xf32, #tpu.memory_space<vmem>>, %arg12: memref<18x64xf32, #tpu.memory_space<vmem>>, %arg13: memref<18x128xf32, #tpu.memory_space<vmem>>, %arg14: memref<32x128xf32, #tpu.memory_space<vmem>>, %arg15: memref<32x128xf32, #tpu.memory_space<vmem>>) attributes {dimension_semantics = [#tpu.dimension_semantics<arbitrary>], iteration_bounds = array<i64: 1>, scalar_prefetch = 0 : i64, scratch_operands = 4 : i64, tpu.core_type = #tpu.core_type<tc>, window_params = [{pipeline_mode = #tpu.pipeline_mode<synchronous>, transform_indices = @transform_0, window_bounds = array<i64: 32, 64>}, {pipeline_mode = #tpu.pipeline_mode<synchronous>, transform_indices = @transform_1, window_bounds = array<i64: 3, 64, 128>}, {pipeline_mode = #tpu.pipeline_mode<synchronous>, transform_indices = @transform_2, window_bounds = array<i64: 1, 128>}, {pipeline_mode = #tpu.pipeline_mode<synchronous>, transform_indices = @transform_3, window_bounds = array<i64: 1, 128>}, {pipeline_mode = #tpu.pipeline_mode<synchronous>, transform_indices = @transform_4, window_bounds = array<i64: 1, 128>}, {pipeline_mode = #tpu.pipeline_mode<synchronous>, transform_indices = @transform_5, window_bounds = array<i64: 3, 128, 128>}, {pipeline_mode = #tpu.pipeline_mode<synchronous>, transform_indices = @transform_6, window_bounds = array<i64: 1, 128>}, {pipeline_mode = #tpu.pipeline_mode<synchronous>, transform_indices = @transform_7, window_bounds = array<i64: 1, 128>}, {pipeline_mode = #tpu.pipeline_mode<synchronous>, transform_indices = @transform_8, window_bounds = array<i64: 1, 128>}, {pipeline_mode = #tpu.pipeline_mode<synchronous>, transform_indices = @transform_9, window_bounds = array<i64: 128, 128>}, {pipeline_mode = #tpu.pipeline_mode<synchronous>, transform_indices = @transform_10, window_bounds = array<i64: 32, 128>}]} {
    %cst = arith.constant 0.000000e+00 : f32
    %0 = vector.broadcast %cst : f32 to vector<18x64xf32>
    %c0 = arith.constant 0 : index
    %c0_0 = arith.constant 0 : index
    %1 = vector.load %arg12[%c0, %c0_0] : memref<18x64xf32, #tpu.memory_space<vmem>>, vector<18x64xf32>
    tpu.vector_store %arg12[%c0, %c0_0], %0 {strides = array<i32>} : memref<18x64xf32, #tpu.memory_space<vmem>>, vector<18x64xf32>,
    %cst_1 = arith.constant 0.000000e+00 : f32
    %2 = vector.broadcast %cst_1 : f32 to vector<18x128xf32>
    %c0_2 = arith.constant 0 : index
    %c0_3 = arith.constant 0 : index
    %3 = vector.load %arg13[%c0_2, %c0_3] : memref<18x128xf32, #tpu.memory_space<vmem>>, vector<18x128xf32>
    tpu.vector_store %arg13[%c0_2, %c0_3], %2 {strides = array<i32>} : memref<18x128xf32, #tpu.memory_space<vmem>>, vector<18x128xf32>,
    %c0_4 = arith.constant 0 : index
    %c0_5 = arith.constant 0 : index
    %4 = vector.load %arg3[%c0_4, %c0_5] : memref<1x128xf32, #tpu.memory_space<vmem>>, vector<1x128xf32>
    %c0_6 = arith.constant 0 : index
    %c0_7 = arith.constant 0 : index
    %5 = vector.load %arg1[%c0_6, %c0_7] : memref<32x64xf32, #tpu.memory_space<vmem>>, vector<16x64xf32>
    %c1 = arith.constant 1 : index
    %c0_8 = arith.constant 0 : index
    %6 = vector.load %arg12[%c1, %c0_8] : memref<18x64xf32, #tpu.memory_space<vmem>>, vector<16x64xf32>
    tpu.vector_store %arg12[%c1, %c0_8], %5 {strides = array<i32>} : memref<18x64xf32, #tpu.memory_space<vmem>>, vector<16x64xf32>,
    %c1_9 = arith.constant 1 : index
    %c0_10 = arith.constant 0 : index
    %7 = vector.load %arg12[%c1_9, %c0_10] : memref<18x64xf32, #tpu.memory_space<vmem>>, vector<16x64xf32>
    %8 = arith.truncf %7 : vector<16x64xf32> to vector<16x64xbf16>
    %c1_11 = arith.constant 1 : index
    %c0_12 = arith.constant 0 : index
    %c0_13 = arith.constant 0 : index
    %9 = vector.load %arg2[%c1_11, %c0_12, %c0_13] : memref<3x64x128xbf16, #tpu.memory_space<vmem>>, vector<1x64x128xbf16>
    %10 = vector.shape_cast %9 : vector<1x64x128xbf16> to vector<64x128xbf16>
    %cst_14 = arith.constant dense<0.000000e+00> : vector<16x128xf32>
    %11 = tpu.matmul %8, %10, %cst_14 {dimension_numbers = #tpu.dot_dimension_numbers<[1], [0], [0], [1], [0, 0, 1, 1], [], []>} : vector<16x64xbf16>, vector<64x128xbf16>, vector<16x128xf32> -> vector<16x128xf32>
    %c0_15 = arith.constant 0 : index
    %c0_16 = arith.constant 0 : index
    %12 = vector.load %arg12[%c0_15, %c0_16] : memref<18x64xf32, #tpu.memory_space<vmem>>, vector<16x64xf32>
    %13 = arith.truncf %12 : vector<16x64xf32> to vector<16x64xbf16>
    %c0_17 = arith.constant 0 : index
    %c0_18 = arith.constant 0 : index
    %c0_19 = arith.constant 0 : index
    %14 = vector.load %arg2[%c0_17, %c0_18, %c0_19] : memref<3x64x128xbf16, #tpu.memory_space<vmem>>, vector<1x64x128xbf16>
    %15 = vector.shape_cast %14 : vector<1x64x128xbf16> to vector<64x128xbf16>
    %cst_20 = arith.constant dense<0.000000e+00> : vector<16x128xf32>
    %16 = tpu.matmul %13, %15, %cst_20 {dimension_numbers = #tpu.dot_dimension_numbers<[1], [0], [0], [1], [0, 0, 1, 1], [], []>} : vector<16x64xbf16>, vector<64x128xbf16>, vector<16x128xf32> -> vector<16x128xf32>
    %17 = arith.addf %11, %16 : vector<16x128xf32>
    %c2 = arith.constant 2 : index
    %c0_21 = arith.constant 0 : index
    %18 = vector.load %arg12[%c2, %c0_21] : memref<18x64xf32, #tpu.memory_space<vmem>>, vector<16x64xf32>
    %19 = arith.truncf %18 : vector<16x64xf32> to vector<16x64xbf16>
    %c2_22 = arith.constant 2 : index
    %c0_23 = arith.constant 0 : index
    %c0_24 = arith.constant 0 : index
    %20 = vector.load %arg2[%c2_22, %c0_23, %c0_24] : memref<3x64x128xbf16, #tpu.memory_space<vmem>>, vector<1x64x128xbf16>
    %21 = vector.shape_cast %20 : vector<1x64x128xbf16> to vector<64x128xbf16>
    %cst_25 = arith.constant dense<0.000000e+00> : vector<16x128xf32>
    %22 = tpu.matmul %19, %21, %cst_25 {dimension_numbers = #tpu.dot_dimension_numbers<[1], [0], [0], [1], [0, 0, 1, 1], [], []>} : vector<16x64xbf16>, vector<64x128xbf16>, vector<16x128xf32> -> vector<16x128xf32>
    %23 = arith.addf %17, %22 : vector<16x128xf32>
    %24 = vector.broadcast %4 : vector<1x128xf32> to vector<16x128xf32>
    %25 = arith.addf %23, %24 : vector<16x128xf32>
    %c0_26 = arith.constant 0 : index
    %c0_27 = arith.constant 0 : index
    %26 = vector.load %arg14[%c0_26, %c0_27] : memref<32x128xf32, #tpu.memory_space<vmem>>, vector<16x128xf32>
    tpu.vector_store %arg14[%c0_26, %c0_27], %25 {strides = array<i32>} : memref<32x128xf32, #tpu.memory_space<vmem>>, vector<16x128xf32>,
    %c16 = arith.constant 16 : index
    %c0_28 = arith.constant 0 : index
    %27 = vector.load %arg1[%c16, %c0_28] : memref<32x64xf32, #tpu.memory_space<vmem>>, vector<16x64xf32>
    %c1_29 = arith.constant 1 : index
    %c0_30 = arith.constant 0 : index
    %28 = vector.load %arg12[%c1_29, %c0_30] : memref<18x64xf32, #tpu.memory_space<vmem>>, vector<16x64xf32>
    tpu.vector_store %arg12[%c1_29, %c0_30], %27 {strides = array<i32>} : memref<18x64xf32, #tpu.memory_space<vmem>>, vector<16x64xf32>,
    %c1_31 = arith.constant 1 : index
    %c0_32 = arith.constant 0 : index
    %29 = vector.load %arg12[%c1_31, %c0_32] : memref<18x64xf32, #tpu.memory_space<vmem>>, vector<16x64xf32>
    %30 = arith.truncf %29 : vector<16x64xf32> to vector<16x64xbf16>
    %c1_33 = arith.constant 1 : index
    %c0_34 = arith.constant 0 : index
    %c0_35 = arith.constant 0 : index
    %31 = vector.load %arg2[%c1_33, %c0_34, %c0_35] : memref<3x64x128xbf16, #tpu.memory_space<vmem>>, vector<1x64x128xbf16>
    %32 = vector.shape_cast %31 : vector<1x64x128xbf16> to vector<64x128xbf16>
    %cst_36 = arith.constant dense<0.000000e+00> : vector<16x128xf32>
    %33 = tpu.matmul %30, %32, %cst_36 {dimension_numbers = #tpu.dot_dimension_numbers<[1], [0], [0], [1], [0, 0, 1, 1], [], []>} : vector<16x64xbf16>, vector<64x128xbf16>, vector<16x128xf32> -> vector<16x128xf32>
    %c0_37 = arith.constant 0 : index
    %c0_38 = arith.constant 0 : index
    %34 = vector.load %arg12[%c0_37, %c0_38] : memref<18x64xf32, #tpu.memory_space<vmem>>, vector<16x64xf32>
    %35 = arith.truncf %34 : vector<16x64xf32> to vector<16x64xbf16>
    %c0_39 = arith.constant 0 : index
    %c0_40 = arith.constant 0 : index
    %c0_41 = arith.constant 0 : index
    %36 = vector.load %arg2[%c0_39, %c0_40, %c0_41] : memref<3x64x128xbf16, #tpu.memory_space<vmem>>, vector<1x64x128xbf16>
    %37 = vector.shape_cast %36 : vector<1x64x128xbf16> to vector<64x128xbf16>
    %cst_42 = arith.constant dense<0.000000e+00> : vector<16x128xf32>
    %38 = tpu.matmul %35, %37, %cst_42 {dimension_numbers = #tpu.dot_dimension_numbers<[1], [0], [0], [1], [0, 0, 1, 1], [], []>} : vector<16x64xbf16>, vector<64x128xbf16>, vector<16x128xf32> -> vector<16x128xf32>
    %39 = arith.addf %33, %38 : vector<16x128xf32>
    %c2_43 = arith.constant 2 : index
    %c0_44 = arith.constant 0 : index
    %40 = vector.load %arg12[%c2_43, %c0_44] : memref<18x64xf32, #tpu.memory_space<vmem>>, vector<16x64xf32>
    %41 = arith.truncf %40 : vector<16x64xf32> to vector<16x64xbf16>
    %c2_45 = arith.constant 2 : index
    %c0_46 = arith.constant 0 : index
    %c0_47 = arith.constant 0 : index
    %42 = vector.load %arg2[%c2_45, %c0_46, %c0_47] : memref<3x64x128xbf16, #tpu.memory_space<vmem>>, vector<1x64x128xbf16>
    %43 = vector.shape_cast %42 : vector<1x64x128xbf16> to vector<64x128xbf16>
    %cst_48 = arith.constant dense<0.000000e+00> : vector<16x128xf32>
    %44 = tpu.matmul %41, %43, %cst_48 {dimension_numbers = #tpu.dot_dimension_numbers<[1], [0], [0], [1], [0, 0, 1, 1], [], []>} : vector<16x64xbf16>, vector<64x128xbf16>, vector<16x128xf32> -> vector<16x128xf32>
    %45 = arith.addf %39, %44 : vector<16x128xf32>
    %46 = vector.broadcast %4 : vector<1x128xf32> to vector<16x128xf32>
    %47 = arith.addf %45, %46 : vector<16x128xf32>
    %c16_49 = arith.constant 16 : index
    %c0_50 = arith.constant 0 : index
    %48 = vector.load %arg14[%c16_49, %c0_50] : memref<32x128xf32, #tpu.memory_space<vmem>>, vector<16x128xf32>
    tpu.vector_store %arg14[%c16_49, %c0_50], %47 {strides = array<i32>} : memref<32x128xf32, #tpu.memory_space<vmem>>, vector<16x128xf32>,
    %c0_51 = arith.constant 0 : index
    %c0_52 = arith.constant 0 : index
    %49 = vector.load %arg14[%c0_51, %c0_52] : memref<32x128xf32, #tpu.memory_space<vmem>>, vector<32x128xf32>
    %c0_53 = arith.constant 0 : index
    %c0_54 = arith.constant 0 : index
    %50 = vector.load %arg4[%c0_53, %c0_54] : memref<1x128xf32, #tpu.memory_space<vmem>>, vector<1x128xf32>
    %c0_55 = arith.constant 0 : index
    %c0_56 = arith.constant 0 : index
    %51 = vector.load %arg5[%c0_55, %c0_56] : memref<1x128xf32, #tpu.memory_space<vmem>>, vector<1x128xf32>
    %cst_57 = arith.constant dense<0.000000e+00> : vector<128xf32>
    %52 = vector.multi_reduction <add>, %49, %cst_57 [0] : vector<32x128xf32> to vector<128xf32>
    %53 = vector.shape_cast %52 : vector<128xf32> to vector<1x128xf32>
    %c0_58 = arith.constant 0 : index
    %c0_59 = arith.constant 0 : index
    %54 = vector.load %arg10[%c0_58, %c0_59] : memref<128x128xf32, #tpu.memory_space<vmem>>, vector<128x128xf32>
    %cst_60 = arith.constant dense<0.000000e+00> : vector<1x128xf32>
    %55 = tpu.matmul %53, %54, %cst_60 {dimension_numbers = #tpu.dot_dimension_numbers<[1], [0], [0], [1], [0, 0, 1, 1], [], []>} : vector<1x128xf32>, vector<128x128xf32>, vector<1x128xf32> -> vector<1x128xf32>
    %56 = arith.mulf %49, %49 : vector<32x128xf32>
    %cst_61 = arith.constant dense<0.000000e+00> : vector<128xf32>
    %57 = vector.multi_reduction <add>, %56, %cst_61 [0] : vector<32x128xf32> to vector<128xf32>
    %58 = vector.shape_cast %57 : vector<128xf32> to vector<1x128xf32>
    %c0_62 = arith.constant 0 : index
    %c0_63 = arith.constant 0 : index
    %59 = vector.load %arg10[%c0_62, %c0_63] : memref<128x128xf32, #tpu.memory_space<vmem>>, vector<128x128xf32>
    %cst_64 = arith.constant dense<0.000000e+00> : vector<1x128xf32>
    %60 = tpu.matmul %58, %59, %cst_64 {dimension_numbers = #tpu.dot_dimension_numbers<[1], [0], [0], [1], [0, 0, 1, 1], [], []>} : vector<1x128xf32>, vector<128x128xf32>, vector<1x128xf32> -> vector<1x128xf32>
    %cst_65 = arith.constant 0.001953125 : f32
    %61 = vector.broadcast %cst_65 : f32 to vector<1x128xf32>
    %62 = arith.mulf %55, %61 : vector<1x128xf32>
    %cst_66 = arith.constant 0.001953125 : f32
    %63 = vector.broadcast %cst_66 : f32 to vector<1x128xf32>
    %64 = arith.mulf %60, %63 : vector<1x128xf32>
    %65 = arith.mulf %62, %62 : vector<1x128xf32>
    %66 = arith.subf %64, %65 : vector<1x128xf32>
    %cst_67 = arith.constant 9.99999974E-6 : f32
    %67 = vector.broadcast %cst_67 : f32 to vector<1x128xf32>
    %68 = arith.addf %66, %67 : vector<1x128xf32>
    %69 = math.rsqrt %68 : vector<1x128xf32>
    %70 = arith.mulf %50, %69 : vector<1x128xf32>
    %71 = arith.mulf %62, %70 : vector<1x128xf32>
    %72 = arith.subf %51, %71 : vector<1x128xf32>
    %73 = vector.broadcast %70 : vector<1x128xf32> to vector<32x128xf32>
    %74 = arith.mulf %49, %73 : vector<32x128xf32>
    %75 = vector.broadcast %72 : vector<1x128xf32> to vector<32x128xf32>
    %76 = arith.addf %74, %75 : vector<32x128xf32>
    %cst_68 = arith.constant 0.000000e+00 : f32
    %77 = vector.broadcast %cst_68 : f32 to vector<32x128xf32>
    %78 = arith.maximumf %76, %77 : vector<32x128xf32>
    %cst_69 = arith.constant 3.33333325 : f32
    %79 = vector.broadcast %cst_69 : f32 to vector<32x128xf32>
    %80 = arith.mulf %76, %79 : vector<32x128xf32>
    %81 = math.exp %80 : vector<32x128xf32>
    %cst_70 = arith.constant 1.000000e+00 : f32
    %82 = vector.broadcast %cst_70 : f32 to vector<32x128xf32>
    %83 = arith.subf %81, %82 : vector<32x128xf32>
    %cst_71 = arith.constant 3.000000e-01 : f32
    %84 = vector.broadcast %cst_71 : f32 to vector<32x128xf32>
    %85 = arith.mulf %84, %83 : vector<32x128xf32>
    %cst_72 = arith.constant 0.000000e+00 : f32
    %86 = vector.broadcast %cst_72 : f32 to vector<32x128xf32>
    %87 = arith.minimumf %86, %85 : vector<32x128xf32>
    %88 = arith.addf %78, %87 : vector<32x128xf32>
    %c0_73 = arith.constant 0 : index
    %c0_74 = arith.constant 0 : index
    %89 = vector.load %arg7[%c0_73, %c0_74] : memref<1x128xf32, #tpu.memory_space<vmem>>, vector<1x128xf32>
    %90 = vector.extract_strided_slice %88 {offsets = [0, 0], sizes = [16, 128], strides = [1, 1]} : vector<32x128xf32> to vector<16x128xf32>
    %c1_75 = arith.constant 1 : index
    %c0_76 = arith.constant 0 : index
    %91 = vector.load %arg13[%c1_75, %c0_76] : memref<18x128xf32, #tpu.memory_space<vmem>>, vector<16x128xf32>
    tpu.vector_store %arg13[%c1_75, %c0_76], %90 {strides = array<i32>} : memref<18x128xf32, #tpu.memory_space<vmem>>, vector<16x128xf32>,
    %c1_77 = arith.constant 1 : index
    %c0_78 = arith.constant 0 : index
    %92 = vector.load %arg13[%c1_77, %c0_78] : memref<18x128xf32, #tpu.memory_space<vmem>>, vector<16x128xf32>
    %93 = arith.truncf %92 : vector<16x128xf32> to vector<16x128xbf16>
    %c1_79 = arith.constant 1 : index
    %c0_80 = arith.constant 0 : index
    %c0_81 = arith.constant 0 : index
    %94 = vector.load %arg6[%c1_79, %c0_80, %c0_81] : memref<3x128x128xbf16, #tpu.memory_space<vmem>>, vector<1x128x128xbf16>
    %95 = vector.shape_cast %94 : vector<1x128x128xbf16> to vector<128x128xbf16>
    %cst_82 = arith.constant dense<0.000000e+00> : vector<16x128xf32>
    %96 = tpu.matmul %93, %95, %cst_82 {dimension_numbers = #tpu.dot_dimension_numbers<[1], [0], [0], [1], [0, 0, 1, 1], [], []>} : vector<16x128xbf16>, vector<128x128xbf16>, vector<16x128xf32> -> vector<16x128xf32>
    %c0_83 = arith.constant 0 : index
    %c0_84 = arith.constant 0 : index
    %97 = vector.load %arg13[%c0_83, %c0_84] : memref<18x128xf32, #tpu.memory_space<vmem>>, vector<16x128xf32>
    %98 = arith.truncf %97 : vector<16x128xf32> to vector<16x128xbf16>
    %c0_85 = arith.constant 0 : index
    %c0_86 = arith.constant 0 : index
    %c0_87 = arith.constant 0 : index
    %99 = vector.load %arg6[%c0_85, %c0_86, %c0_87] : memref<3x128x128xbf16, #tpu.memory_space<vmem>>, vector<1x128x128xbf16>
    %100 = vector.shape_cast %99 : vector<1x128x128xbf16> to vector<128x128xbf16>
    %cst_88 = arith.constant dense<0.000000e+00> : vector<16x128xf32>
    %101 = tpu.matmul %98, %100, %cst_88 {dimension_numbers = #tpu.dot_dimension_numbers<[1], [0], [0], [1], [0, 0, 1, 1], [], []>} : vector<16x128xbf16>, vector<128x128xbf16>, vector<16x128xf32> -> vector<16x128xf32>
    %102 = arith.addf %96, %101 : vector<16x128xf32>
    %c2_89 = arith.constant 2 : index
    %c0_90 = arith.constant 0 : index
    %103 = vector.load %arg13[%c2_89, %c0_90] : memref<18x128xf32, #tpu.memory_space<vmem>>, vector<16x128xf32>
    %104 = arith.truncf %103 : vector<16x128xf32> to vector<16x128xbf16>
    %c2_91 = arith.constant 2 : index
    %c0_92 = arith.constant 0 : index
    %c0_93 = arith.constant 0 : index
    %105 = vector.load %arg6[%c2_91, %c0_92, %c0_93] : memref<3x128x128xbf16, #tpu.memory_space<vmem>>, vector<1x128x128xbf16>
    %106 = vector.shape_cast %105 : vector<1x128x128xbf16> to vector<128x128xbf16>
    %cst_94 = arith.constant dense<0.000000e+00> : vector<16x128xf32>
    %107 = tpu.matmul %104, %106, %cst_94 {dimension_numbers = #tpu.dot_dimension_numbers<[1], [0], [0], [1], [0, 0, 1, 1], [], []>} : vector<16x128xbf16>, vector<128x128xbf16>, vector<16x128xf32> -> vector<16x128xf32>
    %108 = arith.addf %102, %107 : vector<16x128xf32>
    %109 = vector.broadcast %89 : vector<1x128xf32> to vector<16x128xf32>
    %110 = arith.addf %108, %109 : vector<16x128xf32>
    %c0_95 = arith.constant 0 : index
    %c0_96 = arith.constant 0 : index
    %111 = vector.load %arg15[%c0_95, %c0_96] : memref<32x128xf32, #tpu.memory_space<vmem>>, vector<16x128xf32>
    tpu.vector_store %arg15[%c0_95, %c0_96], %110 {strides = array<i32>} : memref<32x128xf32, #tpu.memory_space<vmem>>, vector<16x128xf32>,
    %112 = vector.extract_strided_slice %88 {offsets = [16, 0], sizes = [16, 128], strides = [1, 1]} : vector<32x128xf32> to vector<16x128xf32>
    %c1_97 = arith.constant 1 : index
    %c0_98 = arith.constant 0 : index
    %113 = vector.load %arg13[%c1_97, %c0_98] : memref<18x128xf32, #tpu.memory_space<vmem>>, vector<16x128xf32>
    tpu.vector_store %arg13[%c1_97, %c0_98], %112 {strides = array<i32>} : memref<18x128xf32, #tpu.memory_space<vmem>>, vector<16x128xf32>,
    %c1_99 = arith.constant 1 : index
    %c0_100 = arith.constant 0 : index
    %114 = vector.load %arg13[%c1_99, %c0_100] : memref<18x128xf32, #tpu.memory_space<vmem>>, vector<16x128xf32>
    %115 = arith.truncf %114 : vector<16x128xf32> to vector<16x128xbf16>
    %c1_101 = arith.constant 1 : index
    %c0_102 = arith.constant 0 : index
    %c0_103 = arith.constant 0 : index
    %116 = vector.load %arg6[%c1_101, %c0_102, %c0_103] : memref<3x128x128xbf16, #tpu.memory_space<vmem>>, vector<1x128x128xbf16>
    %117 = vector.shape_cast %116 : vector<1x128x128xbf16> to vector<128x128xbf16>
    %cst_104 = arith.constant dense<0.000000e+00> : vector<16x128xf32>
    %118 = tpu.matmul %115, %117, %cst_104 {dimension_numbers = #tpu.dot_dimension_numbers<[1], [0], [0], [1], [0, 0, 1, 1], [], []>} : vector<16x128xbf16>, vector<128x128xbf16>, vector<16x128xf32> -> vector<16x128xf32>
    %c0_105 = arith.constant 0 : index
    %c0_106 = arith.constant 0 : index
    %119 = vector.load %arg13[%c0_105, %c0_106] : memref<18x128xf32, #tpu.memory_space<vmem>>, vector<16x128xf32>
    %120 = arith.truncf %119 : vector<16x128xf32> to vector<16x128xbf16>
    %c0_107 = arith.constant 0 : index
    %c0_108 = arith.constant 0 : index
    %c0_109 = arith.constant 0 : index
    %121 = vector.load %arg6[%c0_107, %c0_108, %c0_109] : memref<3x128x128xbf16, #tpu.memory_space<vmem>>, vector<1x128x128xbf16>
    %122 = vector.shape_cast %121 : vector<1x128x128xbf16> to vector<128x128xbf16>
    %cst_110 = arith.constant dense<0.000000e+00> : vector<16x128xf32>
    %123 = tpu.matmul %120, %122, %cst_110 {dimension_numbers = #tpu.dot_dimension_numbers<[1], [0], [0], [1], [0, 0, 1, 1], [], []>} : vector<16x128xbf16>, vector<128x128xbf16>, vector<16x128xf32> -> vector<16x128xf32>
    %124 = arith.addf %118, %123 : vector<16x128xf32>
    %c2_111 = arith.constant 2 : index
    %c0_112 = arith.constant 0 : index
    %125 = vector.load %arg13[%c2_111, %c0_112] : memref<18x128xf32, #tpu.memory_space<vmem>>, vector<16x128xf32>
    %126 = arith.truncf %125 : vector<16x128xf32> to vector<16x128xbf16>
    %c2_113 = arith.constant 2 : index
    %c0_114 = arith.constant 0 : index
    %c0_115 = arith.constant 0 : index
    %127 = vector.load %arg6[%c2_113, %c0_114, %c0_115] : memref<3x128x128xbf16, #tpu.memory_space<vmem>>, vector<1x128x128xbf16>
    %128 = vector.shape_cast %127 : vector<1x128x128xbf16> to vector<128x128xbf16>
    %cst_116 = arith.constant dense<0.000000e+00> : vector<16x128xf32>
    %129 = tpu.matmul %126, %128, %cst_116 {dimension_numbers = #tpu.dot_dimension_numbers<[1], [0], [0], [1], [0, 0, 1, 1], [], []>} : vector<16x128xbf16>, vector<128x128xbf16>, vector<16x128xf32> -> vector<16x128xf32>
    %130 = arith.addf %124, %129 : vector<16x128xf32>
    %131 = vector.broadcast %89 : vector<1x128xf32> to vector<16x128xf32>
    %132 = arith.addf %130, %131 : vector<16x128xf32>
    %c16_117 = arith.constant 16 : index
    %c0_118 = arith.constant 0 : index
    %133 = vector.load %arg15[%c16_117, %c0_118] : memref<32x128xf32, #tpu.memory_space<vmem>>, vector<16x128xf32>
    tpu.vector_store %arg15[%c16_117, %c0_118], %132 {strides = array<i32>} : memref<32x128xf32, #tpu.memory_space<vmem>>, vector<16x128xf32>,
    %c0_119 = arith.constant 0 : index
    %c0_120 = arith.constant 0 : index
    %134 = vector.load %arg15[%c0_119, %c0_120] : memref<32x128xf32, #tpu.memory_space<vmem>>, vector<32x128xf32>
    %c0_121 = arith.constant 0 : index
    %c0_122 = arith.constant 0 : index
    %135 = vector.load %arg8[%c0_121, %c0_122] : memref<1x128xf32, #tpu.memory_space<vmem>>, vector<1x128xf32>
    %c0_123 = arith.constant 0 : index
    %c0_124 = arith.constant 0 : index
    %136 = vector.load %arg9[%c0_123, %c0_124] : memref<1x128xf32, #tpu.memory_space<vmem>>, vector<1x128xf32>
    %cst_125 = arith.constant dense<0.000000e+00> : vector<128xf32>
    %137 = vector.multi_reduction <add>, %134, %cst_125 [0] : vector<32x128xf32> to vector<128xf32>
    %138 = vector.shape_cast %137 : vector<128xf32> to vector<1x128xf32>
    %c0_126 = arith.constant 0 : index
    %c0_127 = arith.constant 0 : index
    %139 = vector.load %arg10[%c0_126, %c0_127] : memref<128x128xf32, #tpu.memory_space<vmem>>, vector<128x128xf32>
    %cst_128 = arith.constant dense<0.000000e+00> : vector<1x128xf32>
    %140 = tpu.matmul %138, %139, %cst_128 {dimension_numbers = #tpu.dot_dimension_numbers<[1], [0], [0], [1], [0, 0, 1, 1], [], []>} : vector<1x128xf32>, vector<128x128xf32>, vector<1x128xf32> -> vector<1x128xf32>
    %141 = arith.mulf %134, %134 : vector<32x128xf32>
    %cst_129 = arith.constant dense<0.000000e+00> : vector<128xf32>
    %142 = vector.multi_reduction <add>, %141, %cst_129 [0] : vector<32x128xf32> to vector<128xf32>
    %143 = vector.shape_cast %142 : vector<128xf32> to vector<1x128xf32>
    %c0_130 = arith.constant 0 : index
    %c0_131 = arith.constant 0 : index
    %144 = vector.load %arg10[%c0_130, %c0_131] : memref<128x128xf32, #tpu.memory_space<vmem>>, vector<128x128xf32>
    %cst_132 = arith.constant dense<0.000000e+00> : vector<1x128xf32>
    %145 = tpu.matmul %143, %144, %cst_132 {dimension_numbers = #tpu.dot_dimension_numbers<[1], [0], [0], [1], [0, 0, 1, 1], [], []>} : vector<1x128xf32>, vector<128x128xf32>, vector<1x128xf32> -> vector<1x128xf32>
    %cst_133 = arith.constant 0.001953125 : f32
    %146 = vector.broadcast %cst_133 : f32 to vector<1x128xf32>
    %147 = arith.mulf %140, %146 : vector<1x128xf32>
    %cst_134 = arith.constant 0.001953125 : f32
    %148 = vector.broadcast %cst_134 : f32 to vector<1x128xf32>
    %149 = arith.mulf %145, %148 : vector<1x128xf32>
    %150 = arith.mulf %147, %147 : vector<1x128xf32>
    %151 = arith.subf %149, %150 : vector<1x128xf32>
    %cst_135 = arith.constant 9.99999974E-6 : f32
    %152 = vector.broadcast %cst_135 : f32 to vector<1x128xf32>
    %153 = arith.addf %151, %152 : vector<1x128xf32>
    %154 = math.rsqrt %153 : vector<1x128xf32>
    %155 = arith.mulf %135, %154 : vector<1x128xf32>
    %156 = arith.mulf %147, %155 : vector<1x128xf32>
    %157 = arith.subf %136, %156 : vector<1x128xf32>
    %158 = vector.broadcast %155 : vector<1x128xf32> to vector<32x128xf32>
    %159 = arith.mulf %134, %158 : vector<32x128xf32>
    %160 = vector.broadcast %157 : vector<1x128xf32> to vector<32x128xf32>
    %161 = arith.addf %159, %160 : vector<32x128xf32>
    %c0_136 = arith.constant 0 : index
    %c0_137 = arith.constant 0 : index
    %162 = vector.load %arg11[%c0_136, %c0_137] : memref<32x128xf32, #tpu.memory_space<vmem>>, vector<32x128xf32>
    tpu.vector_store %arg11[%c0_136, %c0_137], %161 {strides = array<i32>} : memref<32x128xf32, #tpu.memory_space<vmem>>, vector<32x128xf32>,
    return
  }
  func.func @transform_0(%arg0: i32) -> (i32, i32) {
    %c0_i32 = arith.constant 0 : i32
    %c0_i32_0 = arith.constant 0 : i32
    %c0_i32_1 = arith.constant 0 : i32
    return %c0_i32, %c0_i32_0 : i32, i32
  }
  func.func @transform_1(%arg0: i32) -> (i32, i32, i32) {
    %c0_i32 = arith.constant 0 : i32
    %c0_i32_0 = arith.constant 0 : i32
    %c0_i32_1 = arith.constant 0 : i32
    %c0_i32_2 = arith.constant 0 : i32
    return %c0_i32, %c0_i32_0, %c0_i32_1 : i32, i32, i32
  }
  func.func @transform_2(%arg0: i32) -> (i32, i32) {
    %c0_i32 = arith.constant 0 : i32
    %c0_i32_0 = arith.constant 0 : i32
    %c0_i32_1 = arith.constant 0 : i32
    return %c0_i32, %c0_i32_0 : i32, i32
  }
  func.func @transform_3(%arg0: i32) -> (i32, i32) {
    %c0_i32 = arith.constant 0 : i32
    %c0_i32_0 = arith.constant 0 : i32
    %c0_i32_1 = arith.constant 0 : i32
    return %c0_i32, %c0_i32_0 : i32, i32
  }
  func.func @transform_4(%arg0: i32) -> (i32, i32) {
    %c0_i32 = arith.constant 0 : i32
    %c0_i32_0 = arith.constant 0 : i32
    %c0_i32_1 = arith.constant 0 : i32
    return %c0_i32, %c0_i32_0 : i32, i32
  }
  func.func @transform_5(%arg0: i32) -> (i32, i32, i32) {
    %c0_i32 = arith.constant 0 : i32
    %c0_i32_0 = arith.constant 0 : i32
    %c0_i32_1 = arith.constant 0 : i32
    %c0_i32_2 = arith.constant 0 : i32
    return %c0_i32, %c0_i32_0, %c0_i32_1 : i32, i32, i32
  }
  func.func @transform_6(%arg0: i32) -> (i32, i32) {
    %c0_i32 = arith.constant 0 : i32
    %c0_i32_0 = arith.constant 0 : i32
    %c0_i32_1 = arith.constant 0 : i32
    return %c0_i32, %c0_i32_0 : i32, i32
  }
  func.func @transform_7(%arg0: i32) -> (i32, i32) {
    %c0_i32 = arith.constant 0 : i32
    %c0_i32_0 = arith.constant 0 : i32
    %c0_i32_1 = arith.constant 0 : i32
    return %c0_i32, %c0_i32_0 : i32, i32
  }
  func.func @transform_8(%arg0: i32) -> (i32, i32) {
    %c0_i32 = arith.constant 0 : i32
    %c0_i32_0 = arith.constant 0 : i32
    %c0_i32_1 = arith.constant 0 : i32
    return %c0_i32, %c0_i32_0 : i32, i32
  }
  func.func @transform_9(%arg0: i32) -> (i32, i32) {
    %c0_i32 = arith.constant 0 : i32
    %c0_i32_0 = arith.constant 0 : i32
    %c0_i32_1 = arith.constant 0 : i32
    return %c0_i32, %c0_i32_0 : i32, i32
  }
  func.func @transform_10(%arg0: i32) -> (i32, i32) {
    %c0_i32 = arith.constant 0 : i32
    %c0_i32_0 = arith.constant 0 : i32
    %c0_i32_1 = arith.constant 0 : i32
    return %c0_i32, %c0_i32_0 : i32, i32
  }
}

</mosaic_0001>

<llo_original>
// kernel: tile.33
$region0: #{tile.33}
  #allocation0 [shape = 's32[1]{0}', space=sflag, size = 0x4, scoped, tag = 'scoped memory for tile.33']
  %s0 = inlined_call_operand.vmem [shape: f32[8], index: 0, kind: input, shape index: {}]
  %s1 = inlined_call_operand.vmem [shape: f32[16,8], index: 1, kind: output, shape index: {}]
  // Predicated region
  $region2: #{tile.33} parent=0 // pred_check
    _
  $region3: #{tile.33} parent=0 // pred_check_branch
    %3 = sbr.rel (0) target = $region5
  $region4: #{tile.33} parent=0 // pred_region
    _
  $region5: #{tile.33} parent=0 // pred_fallthru
    _
  %v4 = vld [vmem:[%s0] ss:$0 sm:$0xff]
  %5 = vst [vmem:[%s1] sm:$0xff] %v4
  %s6 = scalar_lea.vmem %s1, 8
  %7 = vst [vmem:[%s6] sm:$0xff] %v4

// kernel: tile.34
$region0: #{tile.34}
  %s0 = inlined_call_operand.vmem [shape: f32[16,8], index: 0, kind: input, shape index: {}]
  %s1 = inlined_call_operand.vmem [shape: f32[1,128], index: 1, kind: output, shape index: {}]
  $region1: #{tile.34} parent=0
    #allocation0 [shape = 'u8[4096]{0}', space=vmem, size = 0x1000, scoped, tag = 'scoped mem for output reshape']
    %v2 = vld [vmem:[%s0] sm:$0x1]
    %vm3 = vcmask 64512
    %4 = vst.msk [vmem:[#allocation0] sm:$0x1] %vm3, %v2
    %s5 = scalar_lea.vmem %s0, 15
    %v6 = vld [vmem:[%s5] sm:$0x1]
    %7 = vrot.lane.b32.xlu0 %v6, 120
    %v8 = vpop.permute.xlu0 %7
    %vm9 = vcmask 1048512
    %10 = vst.msk [vmem:[#allocation0] sm:$0x1] %vm9, %v8
    %s11 = scalar_lea.vmem %s0, 14
    %v12 = vld [vmem:[%s11] sm:$0x1]
    %13 = vrot.lane.b32.xlu0 %v12, 112
    %v14 = vpop.permute.xlu0 %13
    %vm15 = vcmask 982912
    %16 = vst.msk [vmem:[#allocation0] sm:$0x1] %vm15, %v14
    %s17 = scalar_lea.vmem %s0, 13
    %v18 = vld [vmem:[%s17] sm:$0x1]
    %19 = vrot.lane.b32.xlu0 %v18, 104
    %v20 = vpop.permute.xlu0 %19
    %vm21 = vcmask 917312
    %22 = vst.msk [vmem:[#allocation0] sm:$0x1] %vm21, %v20
    %s23 = scalar_lea.vmem %s0, 12
    %v24 = vld [vmem:[%s23] sm:$0x1]
    %25 = vrot.lane.b32.xlu0 %v24, 96
    %v26 = vpop.permute.xlu0 %25
    %vm27 = vcmask 851712
    %28 = vst.msk [vmem:[#allocation0] sm:$0x1] %vm27, %v26
    %s29 = scalar_lea.vmem %s0, 11
    %v30 = vld [vmem:[%s29] sm:$0x1]
    %31 = vrot.lane.b32.xlu0 %v30, 88
    %v32 = vpop.permute.xlu0 %31
    %vm33 = vcmask 786112
    %34 = vst.msk [vmem:[#allocation0] sm:$0x1] %vm33, %v32
    %s35 = scalar_lea.vmem %s0, 10
    %v36 = vld [vmem:[%s35] sm:$0x1]
    %37 = vrot.lane.b32.xlu0 %v36, 80
    %v38 = vpop.permute.xlu0 %37
    %vm39 = vcmask 720512
    %40 = vst.msk [vmem:[#allocation0] sm:$0x1] %vm39, %v38
    %s41 = scalar_lea.vmem %s0, 9
    %v42 = vld [vmem:[%s41] sm:$0x1]
    %43 = vrot.lane.b32.xlu0 %v42, 72
    %v44 = vpop.permute.xlu0 %43
    %vm45 = vcmask 654912
    %46 = vst.msk [vmem:[#allocation0] sm:$0x1] %vm45, %v44
    %s47 = scalar_lea.vmem %s0, 8
    %v48 = vld [vmem:[%s47] sm:$0x1]
    %49 = vrot.lane.b32.xlu0 %v48, 64
    %v50 = vpop.permute.xlu0 %49
    %vm51 = vcmask 589312
    %52 = vst.msk [vmem:[#allocation0] sm:$0x1] %vm51, %v50
    %s53 = scalar_lea.vmem %s0, 7
    %v54 = vld [vmem:[%s53] sm:$0x1]
    %55 = vrot.lane.b32.xlu0 %v54, 56
    %v56 = vpop.permute.xlu0 %55
    %vm57 = vcmask 523712
    %58 = vst.msk [vmem:[#allocation0] sm:$0x1] %vm57, %v56
    %s59 = scalar_lea.vmem %s0, 6
    %v60 = vld [vmem:[%s59] sm:$0x1]
    %61 = vrot.lane.b32.xlu0 %v60, 48
    %v62 = vpop.permute.xlu0 %61
    %vm63 = vcmask 458112
    %64 = vst.msk [vmem:[#allocation0] sm:$0x1] %vm63, %v62
    %s65 = scalar_lea.vmem %s0, 5
    %v66 = vld [vmem:[%s65] sm:$0x1]
    %67 = vrot.lane.b32.xlu0 %v66, 40
    %v68 = vpop.permute.xlu0 %67
    %vm69 = vcmask 392512
    %70 = vst.msk [vmem:[#allocation0] sm:$0x1] %vm69, %v68
    %s71 = scalar_lea.vmem %s0, 4
    %v72 = vld [vmem:[%s71] sm:$0x1]
    %73 = vrot.lane.b32.xlu0 %v72, 32
    %v74 = vpop.permute.xlu0 %73
    %vm75 = vcmask 326912
    %76 = vst.msk [vmem:[#allocation0] sm:$0x1] %vm75, %v74
    %s77 = scalar_lea.vmem %s0, 3
    %v78 = vld [vmem:[%s77] sm:$0x1]
    %79 = vrot.lane.b32.xlu0 %v78, 24
    %v80 = vpop.permute.xlu0 %79
    %vm81 = vcmask 261312
    %82 = vst.msk [vmem:[#allocation0] sm:$0x1] %vm81, %v80
    %s83 = scalar_lea.vmem %s0, 2
    %v84 = vld [vmem:[%s83] sm:$0x1]
    %85 = vrot.lane.b32.xlu0 %v84, 16
    %v86 = vpop.permute.xlu0 %85
    %vm87 = vcmask 195712
    %88 = vst.msk [vmem:[#allocation0] sm:$0x1] %vm87, %v86
    %s89 = scalar_lea.vmem %s0, 1
    %v90 = vld [vmem:[%s89] sm:$0x1]
    %91 = vrot.lane.b32.xlu0 %v90, 8
    %v92 = vpop.permute.xlu0 %91
    %vm93 = vcmask 130112
    %94 = vst.msk [vmem:[#allocation0] sm:$0x1] %vm93, %v92
    %s96 = ssub.s32 2, 1
    %v97 = vld [vmem:[#allocation0] sm:%s96]
    %s99 = ssub.s32 2, 1
    %100 = vst [vmem:[%s1] sm:%s99] %v97

// kernel: _lambda_.1
$region0: #{_lambda_.1}
  #allocation0 [shape = 'u32[]', space=smem, size = 0x4, offset = 0x4, fixed_abs, tag = 'smem constant byte address 0x4 - core index']
  #allocation1 [shape = 'u32[72,128]{1,0:T(1,128)}', space=vmem, size = 0x9000, scoped, tag = 'internal scratch']
  #allocation2 [shape = 'f32[18,64]{1,0:T(8,128)}', space=vmem, size = 0x3000, scoped, tag = 'scratch operand']
  #allocation3 [shape = 'f32[18,128]{1,0:T(8,128)}', space=vmem, size = 0x3000, scoped, tag = 'scratch operand']
  #allocation4 [shape = 'f32[32,128]{1,0:T(8,128)}', space=vmem, size = 0x4000, scoped, tag = 'scratch operand']
  #allocation5 [shape = 'f32[32,128]{1,0:T(8,128)}', space=vmem, size = 0x4000, scoped, tag = 'scratch operand']
  %s0 = inlined_call_operand.vmem [shape: f32[32,64], index: 0, kind: input, shape index: {}]
  %s1 = inlined_call_operand.vmem [shape: bf16[3,64,128], index: 1, kind: input, shape index: {}]
  %s2 = inlined_call_operand.vmem [shape: f32[1,128], index: 2, kind: input, shape index: {}]
  %s3 = inlined_call_operand.vmem [shape: f32[1,128], index: 3, kind: input, shape index: {}]
  %s4 = inlined_call_operand.vmem [shape: f32[1,128], index: 4, kind: input, shape index: {}]
  %s5 = inlined_call_operand.vmem [shape: bf16[3,128,128], index: 5, kind: input, shape index: {}]
  %s6 = inlined_call_operand.vmem [shape: f32[1,128], index: 6, kind: input, shape index: {}]
  %s7 = inlined_call_operand.vmem [shape: f32[1,128], index: 7, kind: input, shape index: {}]
  %s8 = inlined_call_operand.vmem [shape: f32[1,128], index: 8, kind: input, shape index: {}]
  %s9 = inlined_call_operand.vmem [shape: f32[128,128], index: 9, kind: input, shape index: {}]
  %s10 = inlined_call_operand.vmem [shape: f32[32,128], index: 10, kind: output, shape index: {}]
  %s11 = sld [smem:[#allocation0]]
  $region50: #{_lambda_.1} parent=0
    _
  %s13 = ssub.s32 1, %s11
  %s14 = scalar_select 0, %s13, %s11
  // Predicated region
  $region2: #{_lambda_.1} parent=0 // pred_check
    _
  $region3: #{_lambda_.1} parent=0 // pred_check_branch
    %16 = sbr.rel (0) target = $region5
  $region4: #{_lambda_.1} parent=0 // pred_region
    _
  $region5: #{_lambda_.1} parent=0 // pred_fallthru
    _
  // Predicated region
  $region6: #{_lambda_.1} parent=0 // pred_check
    _
  $region7: #{_lambda_.1} parent=0 // pred_check_branch
    %18 = sbr.rel (0) target = $region9
  $region8: #{_lambda_.1} parent=0 // pred_region
    _
  $region9: #{_lambda_.1} parent=0 // pred_fallthru
    _
  // Predicated region
  $region10: #{_lambda_.1} parent=0 // pred_check
    _
  $region11: #{_lambda_.1} parent=0 // pred_check_branch
    %20 = sbr.rel (0) target = $region13
  $region12: #{_lambda_.1} parent=0 // pred_region
    _
  $region13: #{_lambda_.1} parent=0 // pred_fallthru
    _
  // Predicated region
  $region14: #{_lambda_.1} parent=0 // pred_check
    _
  $region15: #{_lambda_.1} parent=0 // pred_check_branch
    %22 = sbr.rel (0) target = $region17
  $region16: #{_lambda_.1} parent=0 // pred_region
    _
  $region17: #{_lambda_.1} parent=0 // pred_fallthru
    _
  // Predicated region
  $region18: #{_lambda_.1} parent=0 // pred_check
    _
  $region19: #{_lambda_.1} parent=0 // pred_check_branch
    %24 = sbr.rel (0) target = $region21
  $region20: #{_lambda_.1} parent=0 // pred_region
    _
  $region21: #{_lambda_.1} parent=0 // pred_fallthru
    _
  // Predicated region
  $region22: #{_lambda_.1} parent=0 // pred_check
    _
  $region23: #{_lambda_.1} parent=0 // pred_check_branch
    %26 = sbr.rel (0) target = $region25
  $region24: #{_lambda_.1} parent=0 // pred_region
    _
  $region25: #{_lambda_.1} parent=0 // pred_fallthru
    _
  // Predicated region
  $region26: #{_lambda_.1} parent=0 // pred_check
    _
  $region27: #{_lambda_.1} parent=0 // pred_check_branch
    %28 = sbr.rel (0) target = $region29
  $region28: #{_lambda_.1} parent=0 // pred_region
    _
  $region29: #{_lambda_.1} parent=0 // pred_fallthru
    _
  // Predicated region
  $region30: #{_lambda_.1} parent=0 // pred_check
    _
  $region31: #{_lambda_.1} parent=0 // pred_check_branch
    %30 = sbr.rel (0) target = $region33
  $region32: #{_lambda_.1} parent=0 // pred_region
    _
  $region33: #{_lambda_.1} parent=0 // pred_fallthru
    _
  // Predicated region
  $region34: #{_lambda_.1} parent=0 // pred_check
    _
  $region35: #{_lambda_.1} parent=0 // pred_check_branch
    %32 = sbr.rel (0) target = $region37
  $region36: #{_lambda_.1} parent=0 // pred_region
    _
  $region37: #{_lambda_.1} parent=0 // pred_fallthru
    _
  // Predicated region
  $region38: #{_lambda_.1} parent=0 // pred_check
    _
  $region39: #{_lambda_.1} parent=0 // pred_check_branch
    %34 = sbr.rel (0) target = $region41
  $region40: #{_lambda_.1} parent=0 // pred_region
    _
  $region41: #{_lambda_.1} parent=0 // pred_fallthru
    _
  %vm36 = vcmask 523264
  %37 = vst.msk [vmem:[#allocation2] sm:$0xff] %vm36, 0.0
  %38 = vst.msk [vmem:[#allocation2 + $0x8] sm:$0xff] %vm36, 0.0
  %vm39 = vcmask 517120
  %40 = vst.msk [vmem:[#allocation2 + $0x10] sm:$0x3] %vm39, 0.0
  %41 = vst [vmem:[#allocation3] sm:$0xff] 0.0
  %42 = vst [vmem:[#allocation3 + $0x8] sm:$0xff] 0.0
  %43 = vst [vmem:[#allocation3 + $0x10] sm:$0x3] 0.0
  %v44 = vld [vmem:[%s2] sm:$0x1]
  %v45 = vld [vmem:[%s0] sm:$0xff]
  %v46 = vld [vmem:[%s0 + $0x8] sm:$0xff]
  %47 = vst.msk [vmem:[#allocation2 + $0x1] sm:$0xff] %vm36, %v45
  %48 = vst.msk [vmem:[#allocation2 + $0x9] sm:$0xff] %vm36, %v46
  %v49 = vld [vmem:[#allocation2 + $0x1] sm:$0xff]
  %v50 = vld [vmem:[#allocation2 + $0x9] sm:$0xff]
  %v51 = vpack.c.bf16 %v50, %v49
  %s52 = scalar_lea.vmem %s1, 32
  %v53 = vld [vmem:[%s52] sm:$0xf]
  %v54 = vld [vmem:[%s52 + $0x4] sm:$0xf]
  %v55 = vld [vmem:[%s52 + $0x8] sm:$0xf]
  %v56 = vld [vmem:[%s52 + $0xc] sm:$0xf]
  %v57 = vld [vmem:[%s52 + $0x10] sm:$0xf]
  %v58 = vld [vmem:[%s52 + $0x14] sm:$0xf]
  %v59 = vld [vmem:[%s52 + $0x18] sm:$0xf]
  %v60 = vld [vmem:[%s52 + $0x1c] sm:$0xf]
  %v61 = vld [vmem:[#allocation2] sm:$0xff]
  %v62 = vld [vmem:[#allocation2 + $0x8] sm:$0xff]
  %v63 = vpack.c.bf16 %v62, %v61
  %v64 = vld [vmem:[%s1] sm:$0xf]
  %v65 = vld [vmem:[%s1 + $0x4] sm:$0xf]
  %v66 = vld [vmem:[%s1 + $0x8] sm:$0xf]
  %v67 = vld [vmem:[%s1 + $0xc] sm:$0xf]
  %v68 = vld [vmem:[%s1 + $0x10] sm:$0xf]
  %v69 = vld [vmem:[%s1 + $0x14] sm:$0xf]
  %v70 = vld [vmem:[%s1 + $0x18] sm:$0xf]
  %v71 = vld [vmem:[%s1 + $0x1c] sm:$0xf]
  %v80 = vunpack.c.l.b16 %v64
  %v81 = vunpack.c.l.b16 %v65
  %v82 = vunpack.c.l.b16 %v66
  %v83 = vunpack.c.l.b16 %v67
  %v84 = vunpack.c.l.b16 %v68
  %v85 = vunpack.c.l.b16 %v69
  %v86 = vunpack.c.l.b16 %v70
  %v87 = vunpack.c.l.b16 %v71
  %v88 = vpack.c.b16 %v81, %v80
  %v89 = vpack.c.b16 %v83, %v82
  %v90 = vpack.c.b16 %v85, %v84
  %v91 = vpack.c.b16 %v87, %v86
  %v97 = vsel %vm36, %v63, 0
  %99 = vmatpush.bf16.msra.mxu0 0
  %100 = vmatpush.bf16.msra.mxu0 0
  %101 = vmatpush.bf16.msra.mxu0 0
  %102 = vmatpush.bf16.msra.mxu0 0
  %103 = vmatpush.bf16.msra.mxu0 %v91
  %104 = vmatpush.bf16.msra.mxu0 %v90
  %105 = vmatpush.bf16.msra.mxu0 %v89
  %106 = vmatpush.bf16.msra.mxu0 %v88
  %107 = vmatmul.bf16.gmra.mxu0 %v97
  %v108 = vpop.f32.mrf.mxu0
  %v109 = vadd.f32 0.0, %v108
  %v110 = vpop.f32.mrf.mxu0
  %v111 = vadd.f32 0.0, %v110
  %112 = vdwg.mxu0
  %v121 = vunpack.c.l.b16 %v53
  %v122 = vunpack.c.l.b16 %v54
  %v123 = vunpack.c.l.b16 %v55
  %v124 = vunpack.c.l.b16 %v56
  %v125 = vunpack.c.l.b16 %v57
  %v126 = vunpack.c.l.b16 %v58
  %v127 = vunpack.c.l.b16 %v59
  %v128 = vunpack.c.l.b16 %v60
  %v129 = vpack.c.b16 %v122, %v121
  %v130 = vpack.c.b16 %v124, %v123
  %v131 = vpack.c.b16 %v126, %v125
  %v132 = vpack.c.b16 %v128, %v127
  %v138 = vsel %vm36, %v51, 0
  %140 = vmatpush.bf16.msra.mxu0 0
  %141 = vmatpush.bf16.msra.mxu0 0
  %142 = vmatpush.bf16.msra.mxu0 0
  %143 = vmatpush.bf16.msra.mxu0 0
  %144 = vmatpush.bf16.msra.mxu0 %v132
  %145 = vmatpush.bf16.msra.mxu0 %v131
  %146 = vmatpush.bf16.msra.mxu0 %v130
  %147 = vmatpush.bf16.msra.mxu0 %v129
  %148 = vmatmul.bf16.gmra.mxu0 %v138
  %v149 = vpop.f32.mrf.mxu0
  %v150 = vadd.f32 %v109, %v149
  %v151 = vpop.f32.mrf.mxu0
  %v152 = vadd.f32 %v111, %v151
  %153 = vdwg.mxu0
  %v154 = vld [vmem:[#allocation2 + $0x2] sm:$0xff]
  %v155 = vld [vmem:[#allocation2 + $0xa] sm:$0xff]
  %v156 = vpack.c.bf16 %v155, %v154
  %s157 = scalar_lea.vmem %s1, 64
  %v158 = vld [vmem:[%s157] sm:$0xf]
  %v159 = vld [vmem:[%s157 + $0x4] sm:$0xf]
  %v160 = vld [vmem:[%s157 + $0x8] sm:$0xf]
  %v161 = vld [vmem:[%s157 + $0xc] sm:$0xf]
  %v162 = vld [vmem:[%s157 + $0x10] sm:$0xf]
  %v163 = vld [vmem:[%s157 + $0x14] sm:$0xf]
  %v164 = vld [vmem:[%s157 + $0x18] sm:$0xf]
  %v165 = vld [vmem:[%s157 + $0x1c] sm:$0xf]
  %v174 = vunpack.c.l.b16 %v158
  %v175 = vunpack.c.l.b16 %v159
  %v176 = vunpack.c.l.b16 %v160
  %v177 = vunpack.c.l.b16 %v161
  %v178 = vunpack.c.l.b16 %v162
  %v179 = vunpack.c.l.b16 %v163
  %v180 = vunpack.c.l.b16 %v164
  %v181 = vunpack.c.l.b16 %v165
  %v182 = vpack.c.b16 %v175, %v174
  %v183 = vpack.c.b16 %v177, %v176
  %v184 = vpack.c.b16 %v179, %v178
  %v185 = vpack.c.b16 %v181, %v180
  %v191 = vsel %vm36, %v156, 0
  %193 = vmatpush.bf16.msra.mxu0 0
  %194 = vmatpush.bf16.msra.mxu0 0
  %195 = vmatpush.bf16.msra.mxu0 0
  %196 = vmatpush.bf16.msra.mxu0 0
  %197 = vmatpush.bf16.msra.mxu0 %v185
  %198 = vmatpush.bf16.msra.mxu0 %v184
  %199 = vmatpush.bf16.msra.mxu0 %v183
  %200 = vmatpush.bf16.msra.mxu0 %v182
  %201 = vmatmul.bf16.gmra.mxu0 %v191
  %v202 = vpop.f32.mrf.mxu0
  %v203 = vadd.f32 0.0, %v202
  %v204 = vpop.f32.mrf.mxu0
  %v205 = vadd.f32 0.0, %v204
  %206 = vdwg.mxu0
  %v207 = vadd.f32 %v150, %v203
  %v208 = vadd.f32 %v152, %v205
  %v210 = vperm.slane %v44, 0
  %v212 = vadd.f32 %v207, %v210
  %v213 = vadd.f32 %v208, %v210
  %214 = vst [vmem:[#allocation4] sm:$0xff] %v212
  %215 = vst [vmem:[#allocation4 + $0x8] sm:$0xff] %v213
  %v216 = vld [vmem:[%s0 + $0x10] sm:$0xff]
  %v217 = vld [vmem:[%s0 + $0x18] sm:$0xff]
  %218 = vst.msk [vmem:[#allocation2 + $0x1] sm:$0xff] %vm36, %v216
  %219 = vst.msk [vmem:[#allocation2 + $0x9] sm:$0xff] %vm36, %v217
  %v220 = vld [vmem:[#allocation2 + $0x1] sm:$0xff]
  %v221 = vld [vmem:[#allocation2 + $0x9] sm:$0xff]
  %v222 = vpack.c.bf16 %v221, %v220
  %v223 = vld [vmem:[%s52] sm:$0xf]
  %v224 = vld [vmem:[%s52 + $0x4] sm:$0xf]
  %v225 = vld [vmem:[%s52 + $0x8] sm:$0xf]
  %v226 = vld [vmem:[%s52 + $0xc] sm:$0xf]
  %v227 = vld [vmem:[%s52 + $0x10] sm:$0xf]
  %v228 = vld [vmem:[%s52 + $0x14] sm:$0xf]
  %v229 = vld [vmem:[%s52 + $0x18] sm:$0xf]
  %v230 = vld [vmem:[%s52 + $0x1c] sm:$0xf]
  %v231 = vld [vmem:[#allocation2] sm:$0xff]
  %v232 = vld [vmem:[#allocation2 + $0x8] sm:$0xff]
  %v233 = vpack.c.bf16 %v232, %v231
  %v234 = vld [vmem:[%s1] sm:$0xf]
  %v235 = vld [vmem:[%s1 + $0x4] sm:$0xf]
  %v236 = vld [vmem:[%s1 + $0x8] sm:$0xf]
  %v237 = vld [vmem:[%s1 + $0xc] sm:$0xf]
  %v238 = vld [vmem:[%s1 + $0x10] sm:$0xf]
  %v239 = vld [vmem:[%s1 + $0x14] sm:$0xf]
  %v240 = vld [vmem:[%s1 + $0x18] sm:$0xf]
  %v241 = vld [vmem:[%s1 + $0x1c] sm:$0xf]
  %v250 = vunpack.c.l.b16 %v234
  %v251 = vunpack.c.l.b16 %v235
  %v252 = vunpack.c.l.b16 %v236
  %v253 = vunpack.c.l.b16 %v237
  %v254 = vunpack.c.l.b16 %v238
  %v255 = vunpack.c.l.b16 %v239
  %v256 = vunpack.c.l.b16 %v240
  %v257 = vunpack.c.l.b16 %v241
  %v258 = vpack.c.b16 %v251, %v250
  %v259 = vpack.c.b16 %v253, %v252
  %v260 = vpack.c.b16 %v255, %v254
  %v261 = vpack.c.b16 %v257, %v256
  %v267 = vsel %vm36, %v233, 0
  %269 = vmatpush.bf16.msra.mxu0 0
  %270 = vmatpush.bf16.msra.mxu0 0
  %271 = vmatpush.bf16.msra.mxu0 0
  %272 = vmatpush.bf16.msra.mxu0 0
  %273 = vmatpush.bf16.msra.mxu0 %v261
  %274 = vmatpush.bf16.msra.mxu0 %v260
  %275 = vmatpush.bf16.msra.mxu0 %v259
  %276 = vmatpush.bf16.msra.mxu0 %v258
  %277 = vmatmul.bf16.gmra.mxu0 %v267
  %v278 = vpop.f32.mrf.mxu0
  %v279 = vadd.f32 0.0, %v278
  %v280 = vpop.f32.mrf.mxu0
  %v281 = vadd.f32 0.0, %v280
  %282 = vdwg.mxu0
  %v291 = vunpack.c.l.b16 %v223
  %v292 = vunpack.c.l.b16 %v224
  %v293 = vunpack.c.l.b16 %v225
  %v294 = vunpack.c.l.b16 %v226
  %v295 = vunpack.c.l.b16 %v227
  %v296 = vunpack.c.l.b16 %v228
  %v297 = vunpack.c.l.b16 %v229
  %v298 = vunpack.c.l.b16 %v230
  %v299 = vpack.c.b16 %v292, %v291
  %v300 = vpack.c.b16 %v294, %v293
  %v301 = vpack.c.b16 %v296, %v295
  %v302 = vpack.c.b16 %v298, %v297
  %v308 = vsel %vm36, %v222, 0
  %310 = vmatpush.bf16.msra.mxu0 0
  %311 = vmatpush.bf16.msra.mxu0 0
  %312 = vmatpush.bf16.msra.mxu0 0
  %313 = vmatpush.bf16.msra.mxu0 0
  %314 = vmatpush.bf16.msra.mxu0 %v302
  %315 = vmatpush.bf16.msra.mxu0 %v301
  %316 = vmatpush.bf16.msra.mxu0 %v300
  %317 = vmatpush.bf16.msra.mxu0 %v299
  %318 = vmatmul.bf16.gmra.mxu0 %v308
  %v319 = vpop.f32.mrf.mxu0
  %v320 = vadd.f32 %v279, %v319
  %v321 = vpop.f32.mrf.mxu0
  %v322 = vadd.f32 %v281, %v321
  %323 = vdwg.mxu0
  %v324 = vld [vmem:[#allocation2 + $0x2] sm:$0xff]
  %v325 = vld [vmem:[#allocation2 + $0xa] sm:$0xff]
  %v326 = vpack.c.bf16 %v325, %v324
  %v327 = vld [vmem:[%s157] sm:$0xf]
  %v328 = vld [vmem:[%s157 + $0x4] sm:$0xf]
  %v329 = vld [vmem:[%s157 + $0x8] sm:$0xf]
  %v330 = vld [vmem:[%s157 + $0xc] sm:$0xf]
  %v331 = vld [vmem:[%s157 + $0x10] sm:$0xf]
  %v332 = vld [vmem:[%s157 + $0x14] sm:$0xf]
  %v333 = vld [vmem:[%s157 + $0x18] sm:$0xf]
  %v334 = vld [vmem:[%s157 + $0x1c] sm:$0xf]
  %v343 = vunpack.c.l.b16 %v327
  %v344 = vunpack.c.l.b16 %v328
  %v345 = vunpack.c.l.b16 %v329
  %v346 = vunpack.c.l.b16 %v330
  %v347 = vunpack.c.l.b16 %v331
  %v348 = vunpack.c.l.b16 %v332
  %v349 = vunpack.c.l.b16 %v333
  %v350 = vunpack.c.l.b16 %v334
  %v351 = vpack.c.b16 %v344, %v343
  %v352 = vpack.c.b16 %v346, %v345
  %v353 = vpack.c.b16 %v348, %v347
  %v354 = vpack.c.b16 %v350, %v349
  %v360 = vsel %vm36, %v326, 0
  %362 = vmatpush.bf16.msra.mxu0 0
  %363 = vmatpush.bf16.msra.mxu0 0
  %364 = vmatpush.bf16.msra.mxu0 0
  %365 = vmatpush.bf16.msra.mxu0 0
  %366 = vmatpush.bf16.msra.mxu0 %v354
  %367 = vmatpush.bf16.msra.mxu0 %v353
  %368 = vmatpush.bf16.msra.mxu0 %v352
  %369 = vmatpush.bf16.msra.mxu0 %v351
  %370 = vmatmul.bf16.gmra.mxu0 %v360
  %v371 = vpop.f32.mrf.mxu0
  %v372 = vadd.f32 0.0, %v371
  %v373 = vpop.f32.mrf.mxu0
  %v374 = vadd.f32 0.0, %v373
  %375 = vdwg.mxu0
  %v376 = vadd.f32 %v320, %v372
  %v377 = vadd.f32 %v322, %v374
  %v378 = vadd.f32 %v376, %v210
  %v379 = vadd.f32 %v377, %v210
  %380 = vst [vmem:[#allocation4 + $0x10] sm:$0xff] %v378
  %381 = vst [vmem:[#allocation4 + $0x18] sm:$0xff] %v379
  %v382 = vld [vmem:[#allocation4] sm:$0xff]
  %v383 = vld [vmem:[#allocation4 + $0x8] sm:$0xff]
  %v384 = vld [vmem:[#allocation4 + $0x10] sm:$0xff]
  %v385 = vld [vmem:[#allocation4 + $0x18] sm:$0xff]
  %v386 = vld [vmem:[%s3] sm:$0x1]
  %v387 = vld [vmem:[%s4] sm:$0x1]
  %v388 = vadd.f32 %v382, %v383
  %v389 = vadd.f32 %v388, %v384
  %v390 = vadd.f32 %v389, %v385
  %v391 = vrot.slane %v390, 4
  %v392 = vadd.f32 %v390, %v391
  %v393 = vrot.slane %v392, 2
  %v394 = vadd.f32 %v392, %v393
  %v395 = vrot.slane %v394, 1
  %v396 = vadd.f32 %v394, %v395
  %v397 = vld [vmem:[%s9] sm:$0xff]
  %v398 = vld [vmem:[%s9 + $0x8] sm:$0xff]
  %v399 = vld [vmem:[%s9 + $0x10] sm:$0xff]
  %v400 = vld [vmem:[%s9 + $0x18] sm:$0xff]
  %v401 = vld [vmem:[%s9 + $0x20] sm:$0xff]
  %v402 = vld [vmem:[%s9 + $0x28] sm:$0xff]
  %v403 = vld [vmem:[%s9 + $0x30] sm:$0xff]
  %v404 = vld [vmem:[%s9 + $0x38] sm:$0xff]
  %v405 = vld [vmem:[%s9 + $0x40] sm:$0xff]
  %v406 = vld [vmem:[%s9 + $0x48] sm:$0xff]
  %v407 = vld [vmem:[%s9 + $0x50] sm:$0xff]
  %v408 = vld [vmem:[%s9 + $0x58] sm:$0xff]
  %v409 = vld [vmem:[%s9 + $0x60] sm:$0xff]
  %v410 = vld [vmem:[%s9 + $0x68] sm:$0xff]
  %v411 = vld [vmem:[%s9 + $0x70] sm:$0xff]
  %v412 = vld [vmem:[%s9 + $0x78] sm:$0xff]
  %413 = vmatpush.msra.mxu0 %v412
  %414 = vmatpush.msra.mxu0 %v411
  %415 = vmatpush.msra.mxu0 %v410
  %416 = vmatpush.msra.mxu0 %v409
  %417 = vmatpush.msra.mxu0 %v408
  %418 = vmatpush.msra.mxu0 %v407
  %419 = vmatpush.msra.mxu0 %v406
  %420 = vmatpush.msra.mxu0 %v405
  %421 = vmatpush.msra.mxu0 %v404
  %422 = vmatpush.msra.mxu0 %v403
  %423 = vmatpush.msra.mxu0 %v402
  %424 = vmatpush.msra.mxu0 %v401
  %425 = vmatpush.msra.mxu0 %v400
  %426 = vmatpush.msra.mxu0 %v399
  %427 = vmatpush.msra.mxu0 %v398
  %428 = vmatpush.msra.mxu0 %v397
  %429 = vmatmul.f32.gmra.mxu0 %v396
  %v430 = vpop.f32.mrf.mxu0
  %v431 = vadd.f32 0.0, %v430
  %432 = vdwg.mxu0
  %v433 = vmul.f32 %v382, %v382
  %v434 = vmul.f32 %v383, %v383
  %v435 = vmul.f32 %v384, %v384
  %v436 = vmul.f32 %v385, %v385
  %v437 = vadd.f32 %v433, %v434
  %v438 = vadd.f32 %v437, %v435
  %v439 = vadd.f32 %v438, %v436
  %v440 = vrot.slane %v439, 4
  %v441 = vadd.f32 %v439, %v440
  %v442 = vrot.slane %v441, 2
  %v443 = vadd.f32 %v441, %v442
  %v444 = vrot.slane %v443, 1
  %v445 = vadd.f32 %v443, %v444
  %446 = vmatpush.msra.mxu0 %v412
  %447 = vmatpush.msra.mxu0 %v411
  %448 = vmatpush.msra.mxu0 %v410
  %449 = vmatpush.msra.mxu0 %v409
  %450 = vmatpush.msra.mxu0 %v408
  %451 = vmatpush.msra.mxu0 %v407
  %452 = vmatpush.msra.mxu0 %v406
  %453 = vmatpush.msra.mxu0 %v405
  %454 = vmatpush.msra.mxu0 %v404
  %455 = vmatpush.msra.mxu0 %v403
  %456 = vmatpush.msra.mxu0 %v402
  %457 = vmatpush.msra.mxu0 %v401
  %458 = vmatpush.msra.mxu0 %v400
  %459 = vmatpush.msra.mxu0 %v399
  %460 = vmatpush.msra.mxu0 %v398
  %461 = vmatpush.msra.mxu0 %v397
  %462 = vmatmul.f32.gmra.mxu0 %v445
  %v463 = vpop.f32.mrf.mxu0
  %v464 = vadd.f32 0.0, %v463
  %465 = vdwg.mxu0
  %v466 = vmul.f32 %v431, 0.001953125
  %v467 = vmul.f32 %v464, 0.001953125
  %v468 = vmul.f32 %v466, %v466
  %v469 = vsub.f32 %v467, %v468
  %v470 = vadd.f32 %v469, 1e-05
  %v471 = vrsqrt.pop %v470
  %v472 = vmul.f32 %v471, %v470
  %v473 = vmul.f32 %v472, %v471
  %v474 = vmul.f32 0.5, %v473
  %v475 = vsub.f32 1.5, %v474
  %v476 = vmul.f32 %v471, %v475
  %vm477 = vweird.f32 %v470
  %vm478 = vweird.f32 %v471
  %vm479 = vmor %vm477, %vm478
  %v480 = vsel %vm479, %v471, %v476
  %v481 = vmul.f32 %v386, %v480
  %v482 = vmul.f32 %v466, %v481
  %v483 = vsub.f32 %v387, %v482
  %v485 = vperm.slane %v481, 0
  %v487 = vmul.f32 %v382, %v485
  %v488 = vmul.f32 %v383, %v485
  %v489 = vmul.f32 %v384, %v485
  %v490 = vmul.f32 %v385, %v485
  %v492 = vperm.slane %v483, 0
  %v494 = vadd.f32 %v487, %v492
  %v495 = vadd.f32 %v488, %v492
  %v496 = vadd.f32 %v489, %v492
  %v497 = vadd.f32 %v490, %v492
  %v498 = vmax.f32 %v494, 0.0
  %v499 = vmax.f32 %v495, 0.0
  %v500 = vmax.f32 %v496, 0.0
  %v501 = vmax.f32 %v497, 0.0
  %v502 = vmul.f32 %v494, 3.3333333
  %v503 = vmul.f32 %v495, 3.3333333
  %v504 = vmul.f32 %v496, 3.3333333
  %v505 = vmul.f32 %v497, 3.3333333
  %v506 = vmul.f32 %v502, 1.442695
  %v507 = vpow.pop %v506
  %v508 = vmul.f32 %v503, 1.442695
  %v509 = vpow.pop %v508
  %v510 = vmul.f32 %v504, 1.442695
  %v511 = vpow.pop %v510
  %v512 = vmul.f32 %v505, 1.442695
  %v513 = vpow.pop %v512
  %v514 = vsub.f32 %v507, 1.0
  %v515 = vsub.f32 %v509, 1.0
  %v516 = vsub.f32 %v511, 1.0
  %v517 = vsub.f32 %v513, 1.0
  %v518 = vmul.f32 %v514, 0.3
  %v519 = vmul.f32 %v515, 0.3
  %v520 = vmul.f32 %v516, 0.3
  %v521 = vmul.f32 %v517, 0.3
  %v522 = vmin.f32 %v518, 0.0
  %v523 = vmin.f32 %v519, 0.0
  %v524 = vmin.f32 %v520, 0.0
  %v525 = vmin.f32 %v521, 0.0
  %v526 = vadd.f32 %v498, %v522
  %v527 = vadd.f32 %v499, %v523
  %v528 = vadd.f32 %v500, %v524
  %v529 = vadd.f32 %v501, %v525
  %v530 = vld [vmem:[%s6] sm:$0x1]
  %531 = vst [vmem:[#allocation3 + $0x1] sm:$0xff] %v526
  %532 = vst [vmem:[#allocation3 + $0x9] sm:$0xff] %v527
  %v533 = vld [vmem:[#allocation3 + $0x1] sm:$0xff]
  %v534 = vld [vmem:[#allocation3 + $0x9] sm:$0xff]
  %v535 = vpack.c.bf16 %v534, %v533
  %s536 = scalar_lea.vmem %s5, 64
  %v537 = vld [vmem:[%s536] sm:$0xf]
  %v538 = vld [vmem:[%s536 + $0x4] sm:$0xf]
  %v539 = vld [vmem:[%s536 + $0x8] sm:$0xf]
  %v540 = vld [vmem:[%s536 + $0xc] sm:$0xf]
  %v541 = vld [vmem:[%s536 + $0x10] sm:$0xf]
  %v542 = vld [vmem:[%s536 + $0x14] sm:$0xf]
  %v543 = vld [vmem:[%s536 + $0x18] sm:$0xf]
  %v544 = vld [vmem:[%s536 + $0x1c] sm:$0xf]
  %v545 = vld [vmem:[%s536 + $0x20] sm:$0xf]
  %v546 = vld [vmem:[%s536 + $0x24] sm:$0xf]
  %v547 = vld [vmem:[%s536 + $0x28] sm:$0xf]
  %v548 = vld [vmem:[%s536 + $0x2c] sm:$0xf]
  %v549 = vld [vmem:[%s536 + $0x30] sm:$0xf]
  %v550 = vld [vmem:[%s536 + $0x34] sm:$0xf]
  %v551 = vld [vmem:[%s536 + $0x38] sm:$0xf]
  %v552 = vld [vmem:[%s536 + $0x3c] sm:$0xf]
  %v553 = vld [vmem:[#allocation3] sm:$0xff]
  %v554 = vld [vmem:[#allocation3 + $0x8] sm:$0xff]
  %v555 = vpack.c.bf16 %v554, %v553
  %v556 = vld [vmem:[%s5] sm:$0xf]
  %v557 = vld [vmem:[%s5 + $0x4] sm:$0xf]
  %v558 = vld [vmem:[%s5 + $0x8] sm:$0xf]
  %v559 = vld [vmem:[%s5 + $0xc] sm:$0xf]
  %v560 = vld [vmem:[%s5 + $0x10] sm:$0xf]
  %v561 = vld [vmem:[%s5 + $0x14] sm:$0xf]
  %v562 = vld [vmem:[%s5 + $0x18] sm:$0xf]
  %v563 = vld [vmem:[%s5 + $0x1c] sm:$0xf]
  %v564 = vld [vmem:[%s5 + $0x20] sm:$0xf]
  %v565 = vld [vmem:[%s5 + $0x24] sm:$0xf]
  %v566 = vld [vmem:[%s5 + $0x28] sm:$0xf]
  %v567 = vld [vmem:[%s5 + $0x2c] sm:$0xf]
  %v568 = vld [vmem:[%s5 + $0x30] sm:$0xf]
  %v569 = vld [vmem:[%s5 + $0x34] sm:$0xf]
  %v570 = vld [vmem:[%s5 + $0x38] sm:$0xf]
  %v571 = vld [vmem:[%s5 + $0x3c] sm:$0xf]
  %v588 = vunpack.c.l.b16 %v556
  %v589 = vunpack.c.l.b16 %v557
  %v590 = vunpack.c.l.b16 %v558
  %v591 = vunpack.c.l.b16 %v559
  %v592 = vunpack.c.l.b16 %v560
  %v593 = vunpack.c.l.b16 %v561
  %v594 = vunpack.c.l.b16 %v562
  %v595 = vunpack.c.l.b16 %v563
  %v596 = vunpack.c.l.b16 %v564
  %v597 = vunpack.c.l.b16 %v565
  %v598 = vunpack.c.l.b16 %v566
  %v599 = vunpack.c.l.b16 %v567
  %v600 = vunpack.c.l.b16 %v568
  %v601 = vunpack.c.l.b16 %v569
  %v602 = vunpack.c.l.b16 %v570
  %v603 = vunpack.c.l.b16 %v571
  %v604 = vpack.c.b16 %v589, %v588
  %v605 = vpack.c.b16 %v591, %v590
  %v606 = vpack.c.b16 %v593, %v592
  %v607 = vpack.c.b16 %v595, %v594
  %v608 = vpack.c.b16 %v597, %v596
  %v609 = vpack.c.b16 %v599, %v598
  %v610 = vpack.c.b16 %v601, %v600
  %v611 = vpack.c.b16 %v603, %v602
  %620 = vmatpush.bf16.msra.mxu0 %v611
  %621 = vmatpush.bf16.msra.mxu0 %v610
  %622 = vmatpush.bf16.msra.mxu0 %v609
  %623 = vmatpush.bf16.msra.mxu0 %v608
  %624 = vmatpush.bf16.msra.mxu0 %v607
  %625 = vmatpush.bf16.msra.mxu0 %v606
  %626 = vmatpush.bf16.msra.mxu0 %v605
  %627 = vmatpush.bf16.msra.mxu0 %v604
  %628 = vmatmul.bf16.gmra.mxu0 %v555
  %v629 = vpop.f32.mrf.mxu0
  %v630 = vadd.f32 0.0, %v629
  %v631 = vpop.f32.mrf.mxu0
  %v632 = vadd.f32 0.0, %v631
  %633 = vdwg.mxu0
  %v650 = vunpack.c.l.b16 %v537
  %v651 = vunpack.c.l.b16 %v538
  %v652 = vunpack.c.l.b16 %v539
  %v653 = vunpack.c.l.b16 %v540
  %v654 = vunpack.c.l.b16 %v541
  %v655 = vunpack.c.l.b16 %v542
  %v656 = vunpack.c.l.b16 %v543
  %v657 = vunpack.c.l.b16 %v544
  %v658 = vunpack.c.l.b16 %v545
  %v659 = vunpack.c.l.b16 %v546
  %v660 = vunpack.c.l.b16 %v547
  %v661 = vunpack.c.l.b16 %v548
  %v662 = vunpack.c.l.b16 %v549
  %v663 = vunpack.c.l.b16 %v550
  %v664 = vunpack.c.l.b16 %v551
  %v665 = vunpack.c.l.b16 %v552
  %v666 = vpack.c.b16 %v651, %v650
  %v667 = vpack.c.b16 %v653, %v652
  %v668 = vpack.c.b16 %v655, %v654
  %v669 = vpack.c.b16 %v657, %v656
  %v670 = vpack.c.b16 %v659, %v658
  %v671 = vpack.c.b16 %v661, %v660
  %v672 = vpack.c.b16 %v663, %v662
  %v673 = vpack.c.b16 %v665, %v664
  %682 = vmatpush.bf16.msra.mxu0 %v673
  %683 = vmatpush.bf16.msra.mxu0 %v672
  %684 = vmatpush.bf16.msra.mxu0 %v671
  %685 = vmatpush.bf16.msra.mxu0 %v670
  %686 = vmatpush.bf16.msra.mxu0 %v669
  %687 = vmatpush.bf16.msra.mxu0 %v668
  %688 = vmatpush.bf16.msra.mxu0 %v667
  %689 = vmatpush.bf16.msra.mxu0 %v666
  %690 = vmatmul.bf16.gmra.mxu0 %v535
  %v691 = vpop.f32.mrf.mxu0
  %v692 = vadd.f32 %v630, %v691
  %v693 = vpop.f32.mrf.mxu0
  %v694 = vadd.f32 %v632, %v693
  %695 = vdwg.mxu0
  %v696 = vld [vmem:[#allocation3 + $0x2] sm:$0xff]
  %v697 = vld [vmem:[#allocation3 + $0xa] sm:$0xff]
  %v698 = vpack.c.bf16 %v697, %v696
  %s699 = scalar_lea.vmem %s5, 128
  %v700 = vld [vmem:[%s699] sm:$0xf]
  %v701 = vld [vmem:[%s699 + $0x4] sm:$0xf]
  %v702 = vld [vmem:[%s699 + $0x8] sm:$0xf]
  %v703 = vld [vmem:[%s699 + $0xc] sm:$0xf]
  %v704 = vld [vmem:[%s699 + $0x10] sm:$0xf]
  %v705 = vld [vmem:[%s699 + $0x14] sm:$0xf]
  %v706 = vld [vmem:[%s699 + $0x18] sm:$0xf]
  %v707 = vld [vmem:[%s699 + $0x1c] sm:$0xf]
  %v708 = vld [vmem:[%s699 + $0x20] sm:$0xf]
  %v709 = vld [vmem:[%s699 + $0x24] sm:$0xf]
  %v710 = vld [vmem:[%s699 + $0x28] sm:$0xf]
  %v711 = vld [vmem:[%s699 + $0x2c] sm:$0xf]
  %v712 = vld [vmem:[%s699 + $0x30] sm:$0xf]
  %v713 = vld [vmem:[%s699 + $0x34] sm:$0xf]
  %v714 = vld [vmem:[%s699 + $0x38] sm:$0xf]
  %v715 = vld [vmem:[%s699 + $0x3c] sm:$0xf]
  %v732 = vunpack.c.l.b16 %v700
  %v733 = vunpack.c.l.b16 %v701
  %v734 = vunpack.c.l.b16 %v702
  %v735 = vunpack.c.l.b16 %v703
  %v736 = vunpack.c.l.b16 %v704
  %v737 = vunpack.c.l.b16 %v705
  %v738 = vunpack.c.l.b16 %v706
  %v739 = vunpack.c.l.b16 %v707
  %v740 = vunpack.c.l.b16 %v708
  %v741 = vunpack.c.l.b16 %v709
  %v742 = vunpack.c.l.b16 %v710
  %v743 = vunpack.c.l.b16 %v711
  %v744 = vunpack.c.l.b16 %v712
  %v745 = vunpack.c.l.b16 %v713
  %v746 = vunpack.c.l.b16 %v714
  %v747 = vunpack.c.l.b16 %v715
  %v748 = vpack.c.b16 %v733, %v732
  %v749 = vpack.c.b16 %v735, %v734
  %v750 = vpack.c.b16 %v737, %v736
  %v751 = vpack.c.b16 %v739, %v738
  %v752 = vpack.c.b16 %v741, %v740
  %v753 = vpack.c.b16 %v743, %v742
  %v754 = vpack.c.b16 %v745, %v744
  %v755 = vpack.c.b16 %v747, %v746
  %764 = vmatpush.bf16.msra.mxu0 %v755
  %765 = vmatpush.bf16.msra.mxu0 %v754
  %766 = vmatpush.bf16.msra.mxu0 %v753
  %767 = vmatpush.bf16.msra.mxu0 %v752
  %768 = vmatpush.bf16.msra.mxu0 %v751
  %769 = vmatpush.bf16.msra.mxu0 %v750
  %770 = vmatpush.bf16.msra.mxu0 %v749
  %771 = vmatpush.bf16.msra.mxu0 %v748
  %772 = vmatmul.bf16.gmra.mxu0 %v698
  %v773 = vpop.f32.mrf.mxu0
  %v774 = vadd.f32 0.0, %v773
  %v775 = vpop.f32.mrf.mxu0
  %v776 = vadd.f32 0.0, %v775
  %777 = vdwg.mxu0
  %v778 = vadd.f32 %v692, %v774
  %v779 = vadd.f32 %v694, %v776
  %v781 = vperm.slane %v530, 0
  %v783 = vadd.f32 %v778, %v781
  %v784 = vadd.f32 %v779, %v781
  %785 = vst [vmem:[#allocation5] sm:$0xff] %v783
  %786 = vst [vmem:[#allocation5 + $0x8] sm:$0xff] %v784
  %787 = vst [vmem:[#allocation3 + $0x1] sm:$0xff] %v528
  %788 = vst [vmem:[#allocation3 + $0x9] sm:$0xff] %v529
  %v789 = vld [vmem:[#allocation3 + $0x1] sm:$0xff]
  %v790 = vld [vmem:[#allocation3 + $0x9] sm:$0xff]
  %v791 = vpack.c.bf16 %v790, %v789
  %v792 = vld [vmem:[%s536] sm:$0xf]
  %v793 = vld [vmem:[%s536 + $0x4] sm:$0xf]
  %v794 = vld [vmem:[%s536 + $0x8] sm:$0xf]
  %v795 = vld [vmem:[%s536 + $0xc] sm:$0xf]
  %v796 = vld [vmem:[%s536 + $0x10] sm:$0xf]
  %v797 = vld [vmem:[%s536 + $0x14] sm:$0xf]
  %v798 = vld [vmem:[%s536 + $0x18] sm:$0xf]
  %v799 = vld [vmem:[%s536 + $0x1c] sm:$0xf]
  %v800 = vld [vmem:[%s536 + $0x20] sm:$0xf]
  %v801 = vld [vmem:[%s536 + $0x24] sm:$0xf]
  %v802 = vld [vmem:[%s536 + $0x28] sm:$0xf]
  %v803 = vld [vmem:[%s536 + $0x2c] sm:$0xf]
  %v804 = vld [vmem:[%s536 + $0x30] sm:$0xf]
  %v805 = vld [vmem:[%s536 + $0x34] sm:$0xf]
  %v806 = vld [vmem:[%s536 + $0x38] sm:$0xf]
  %v807 = vld [vmem:[%s536 + $0x3c] sm:$0xf]
  %v808 = vld [vmem:[#allocation3] sm:$0xff]
  %v809 = vld [vmem:[#allocation3 + $0x8] sm:$0xff]
  %v810 = vpack.c.bf16 %v809, %v808
  %v811 = vld [vmem:[%s5] sm:$0xf]
  %v812 = vld [vmem:[%s5 + $0x4] sm:$0xf]
  %v813 = vld [vmem:[%s5 + $0x8] sm:$0xf]
  %v814 = vld [vmem:[%s5 + $0xc] sm:$0xf]
  %v815 = vld [vmem:[%s5 + $0x10] sm:$0xf]
  %v816 = vld [vmem:[%s5 + $0x14] sm:$0xf]
  %v817 = vld [vmem:[%s5 + $0x18] sm:$0xf]
  %v818 = vld [vmem:[%s5 + $0x1c] sm:$0xf]
  %v819 = vld [vmem:[%s5 + $0x20] sm:$0xf]
  %v820 = vld [vmem:[%s5 + $0x24] sm:$0xf]
  %v821 = vld [vmem:[%s5 + $0x28] sm:$0xf]
  %v822 = vld [vmem:[%s5 + $0x2c] sm:$0xf]
  %v823 = vld [vmem:[%s5 + $0x30] sm:$0xf]
  %v824 = vld [vmem:[%s5 + $0x34] sm:$0xf]
  %v825 = vld [vmem:[%s5 + $0x38] sm:$0xf]
  %v826 = vld [vmem:[%s5 + $0x3c] sm:$0xf]
  %v843 = vunpack.c.l.b16 %v811
  %v844 = vunpack.c.l.b16 %v812
  %v845 = vunpack.c.l.b16 %v813
  %v846 = vunpack.c.l.b16 %v814
  %v847 = vunpack.c.l.b16 %v815
  %v848 = vunpack.c.l.b16 %v816
  %v849 = vunpack.c.l.b16 %v817
  %v850 = vunpack.c.l.b16 %v818
  %v851 = vunpack.c.l.b16 %v819
  %v852 = vunpack.c.l.b16 %v820
  %v853 = vunpack.c.l.b16 %v821
  %v854 = vunpack.c.l.b16 %v822
  %v855 = vunpack.c.l.b16 %v823
  %v856 = vunpack.c.l.b16 %v824
  %v857 = vunpack.c.l.b16 %v825
  %v858 = vunpack.c.l.b16 %v826
  %v859 = vpack.c.b16 %v844, %v843
  %v860 = vpack.c.b16 %v846, %v845
  %v861 = vpack.c.b16 %v848, %v847
  %v862 = vpack.c.b16 %v850, %v849
  %v863 = vpack.c.b16 %v852, %v851
  %v864 = vpack.c.b16 %v854, %v853
  %v865 = vpack.c.b16 %v856, %v855
  %v866 = vpack.c.b16 %v858, %v857
  %875 = vmatpush.bf16.msra.mxu0 %v866
  %876 = vmatpush.bf16.msra.mxu0 %v865
  %877 = vmatpush.bf16.msra.mxu0 %v864
  %878 = vmatpush.bf16.msra.mxu0 %v863
  %879 = vmatpush.bf16.msra.mxu0 %v862
  %880 = vmatpush.bf16.msra.mxu0 %v861
  %881 = vmatpush.bf16.msra.mxu0 %v860
  %882 = vmatpush.bf16.msra.mxu0 %v859
  %883 = vmatmul.bf16.gmra.mxu0 %v810
  %v884 = vpop.f32.mrf.mxu0
  %v885 = vadd.f32 0.0, %v884
  %v886 = vpop.f32.mrf.mxu0
  %v887 = vadd.f32 0.0, %v886
  %888 = vdwg.mxu0
  %v905 = vunpack.c.l.b16 %v792
  %v906 = vunpack.c.l.b16 %v793
  %v907 = vunpack.c.l.b16 %v794
  %v908 = vunpack.c.l.b16 %v795
  %v909 = vunpack.c.l.b16 %v796
  %v910 = vunpack.c.l.b16 %v797
  %v911 = vunpack.c.l.b16 %v798
  %v912 = vunpack.c.l.b16 %v799
  %v913 = vunpack.c.l.b16 %v800
  %v914 = vunpack.c.l.b16 %v801
  %v915 = vunpack.c.l.b16 %v802
  %v916 = vunpack.c.l.b16 %v803
  %v917 = vunpack.c.l.b16 %v804
  %v918 = vunpack.c.l.b16 %v805
  %v919 = vunpack.c.l.b16 %v806
  %v920 = vunpack.c.l.b16 %v807
  %v921 = vpack.c.b16 %v906, %v905
  %v922 = vpack.c.b16 %v908, %v907
  %v923 = vpack.c.b16 %v910, %v909
  %v924 = vpack.c.b16 %v912, %v911
  %v925 = vpack.c.b16 %v914, %v913
  %v926 = vpack.c.b16 %v916, %v915
  %v927 = vpack.c.b16 %v918, %v917
  %v928 = vpack.c.b16 %v920, %v919
  %937 = vmatpush.bf16.msra.mxu0 %v928
  %938 = vmatpush.bf16.msra.mxu0 %v927
  %939 = vmatpush.bf16.msra.mxu0 %v926
  %940 = vmatpush.bf16.msra.mxu0 %v925
  %941 = vmatpush.bf16.msra.mxu0 %v924
  %942 = vmatpush.bf16.msra.mxu0 %v923
  %943 = vmatpush.bf16.msra.mxu0 %v922
  %944 = vmatpush.bf16.msra.mxu0 %v921
  %945 = vmatmul.bf16.gmra.mxu0 %v791
  %v946 = vpop.f32.mrf.mxu0
  %v947 = vadd.f32 %v885, %v946
  %v948 = vpop.f32.mrf.mxu0
  %v949 = vadd.f32 %v887, %v948
  %950 = vdwg.mxu0
  %v951 = vld [vmem:[#allocation3 + $0x2] sm:$0xff]
  %v952 = vld [vmem:[#allocation3 + $0xa] sm:$0xff]
  %v953 = vpack.c.bf16 %v952, %v951
  %v954 = vld [vmem:[%s699] sm:$0xf]
  %v955 = vld [vmem:[%s699 + $0x4] sm:$0xf]
  %v956 = vld [vmem:[%s699 + $0x8] sm:$0xf]
  %v957 = vld [vmem:[%s699 + $0xc] sm:$0xf]
  %v958 = vld [vmem:[%s699 + $0x10] sm:$0xf]
  %v959 = vld [vmem:[%s699 + $0x14] sm:$0xf]
  %v960 = vld [vmem:[%s699 + $0x18] sm:$0xf]
  %v961 = vld [vmem:[%s699 + $0x1c] sm:$0xf]
  %v962 = vld [vmem:[%s699 + $0x20] sm:$0xf]
  %v963 = vld [vmem:[%s699 + $0x24] sm:$0xf]
  %v964 = vld [vmem:[%s699 + $0x28] sm:$0xf]
  %v965 = vld [vmem:[%s699 + $0x2c] sm:$0xf]
  %v966 = vld [vmem:[%s699 + $0x30] sm:$0xf]
  %v967 = vld [vmem:[%s699 + $0x34] sm:$0xf]
  %v968 = vld [vmem:[%s699 + $0x38] sm:$0xf]
  %v969 = vld [vmem:[%s699 + $0x3c] sm:$0xf]
  %v986 = vunpack.c.l.b16 %v954
  %v987 = vunpack.c.l.b16 %v955
  %v988 = vunpack.c.l.b16 %v956
  %v989 = vunpack.c.l.b16 %v957
  %v990 = vunpack.c.l.b16 %v958
  %v991 = vunpack.c.l.b16 %v959
  %v992 = vunpack.c.l.b16 %v960
  %v993 = vunpack.c.l.b16 %v961
  %v994 = vunpack.c.l.b16 %v962
  %v995 = vunpack.c.l.b16 %v963
  %v996 = vunpack.c.l.b16 %v964
  %v997 = vunpack.c.l.b16 %v965
  %v998 = vunpack.c.l.b16 %v966
  %v999 = vunpack.c.l.b16 %v967
  %v1000 = vunpack.c.l.b16 %v968
  %v1001 = vunpack.c.l.b16 %v969
  %v1002 = vpack.c.b16 %v987, %v986
  %v1003 = vpack.c.b16 %v989, %v988
  %v1004 = vpack.c.b16 %v991, %v990
  %v1005 = vpack.c.b16 %v993, %v992
  %v1006 = vpack.c.b16 %v995, %v994
  %v1007 = vpack.c.b16 %v997, %v996
  %v1008 = vpack.c.b16 %v999, %v998
  %v1009 = vpack.c.b16 %v1001, %v1000
  %1018 = vmatpush.bf16.msra.mxu0 %v1009
  %1019 = vmatpush.bf16.msra.mxu0 %v1008
  %1020 = vmatpush.bf16.msra.mxu0 %v1007
  %1021 = vmatpush.bf16.msra.mxu0 %v1006
  %1022 = vmatpush.bf16.msra.mxu0 %v1005
  %1023 = vmatpush.bf16.msra.mxu0 %v1004
  %1024 = vmatpush.bf16.msra.mxu0 %v1003
  %1025 = vmatpush.bf16.msra.mxu0 %v1002
  %1026 = vmatmul.bf16.gmra.mxu0 %v953
  %v1027 = vpop.f32.mrf.mxu0
  %v1028 = vadd.f32 0.0, %v1027
  %v1029 = vpop.f32.mrf.mxu0
  %v1030 = vadd.f32 0.0, %v1029
  %1031 = vdwg.mxu0
  %v1032 = vadd.f32 %v947, %v1028
  %v1033 = vadd.f32 %v949, %v1030
  %v1034 = vadd.f32 %v1032, %v781
  %v1035 = vadd.f32 %v1033, %v781
  %1036 = vst [vmem:[#allocation5 + $0x10] sm:$0xff] %v1034
  %1037 = vst [vmem:[#allocation5 + $0x18] sm:$0xff] %v1035
  %v1038 = vld [vmem:[#allocation5] sm:$0xff]
  %v1039 = vld [vmem:[#allocation5 + $0x8] sm:$0xff]
  %v1040 = vld [vmem:[#allocation5 + $0x10] sm:$0xff]
  %v1041 = vld [vmem:[#allocation5 + $0x18] sm:$0xff]
  %v1042 = vld [vmem:[%s7] sm:$0x1]
  %v1043 = vld [vmem:[%s8] sm:$0x1]
  %v1044 = vadd.f32 %v1038, %v1039
  %v1045 = vadd.f32 %v1044, %v1040
  %v1046 = vadd.f32 %v1045, %v1041
  %v1047 = vrot.slane %v1046, 4
  %v1048 = vadd.f32 %v1046, %v1047
  %v1049 = vrot.slane %v1048, 2
  %v1050 = vadd.f32 %v1048, %v1049
  %v1051 = vrot.slane %v1050, 1
  %v1052 = vadd.f32 %v1050, %v1051
  %v1053 = vld [vmem:[%s9] sm:$0xff]
  %v1054 = vld [vmem:[%s9 + $0x8] sm:$0xff]
  %v1055 = vld [vmem:[%s9 + $0x10] sm:$0xff]
  %v1056 = vld [vmem:[%s9 + $0x18] sm:$0xff]
  %v1057 = vld [vmem:[%s9 + $0x20] sm:$0xff]
  %v1058 = vld [vmem:[%s9 + $0x28] sm:$0xff]
  %v1059 = vld [vmem:[%s9 + $0x30] sm:$0xff]
  %v1060 = vld [vmem:[%s9 + $0x38] sm:$0xff]
  %v1061 = vld [vmem:[%s9 + $0x40] sm:$0xff]
  %v1062 = vld [vmem:[%s9 + $0x48] sm:$0xff]
  %v1063 = vld [vmem:[%s9 + $0x50] sm:$0xff]
  %v1064 = vld [vmem:[%s9 + $0x58] sm:$0xff]
  %v1065 = vld [vmem:[%s9 + $0x60] sm:$0xff]
  %v1066 = vld [vmem:[%s9 + $0x68] sm:$0xff]
  %v1067 = vld [vmem:[%s9 + $0x70] sm:$0xff]
  %v1068 = vld [vmem:[%s9 + $0x78] sm:$0xff]
  %1069 = vmatpush.msra.mxu0 %v1068
  %1070 = vmatpush.msra.mxu0 %v1067
  %1071 = vmatpush.msra.mxu0 %v1066
  %1072 = vmatpush.msra.mxu0 %v1065
  %1073 = vmatpush.msra.mxu0 %v1064
  %1074 = vmatpush.msra.mxu0 %v1063
  %1075 = vmatpush.msra.mxu0 %v1062
  %1076 = vmatpush.msra.mxu0 %v1061
  %1077 = vmatpush.msra.mxu0 %v1060
  %1078 = vmatpush.msra.mxu0 %v1059
  %1079 = vmatpush.msra.mxu0 %v1058
  %1080 = vmatpush.msra.mxu0 %v1057
  %1081 = vmatpush.msra.mxu0 %v1056
  %1082 = vmatpush.msra.mxu0 %v1055
  %1083 = vmatpush.msra.mxu0 %v1054
  %1084 = vmatpush.msra.mxu0 %v1053
  %1085 = vmatmul.f32.gmra.mxu0 %v1052
  %v1086 = vpop.f32.mrf.mxu0
  %v1087 = vadd.f32 0.0, %v1086
  %1088 = vdwg.mxu0
  %v1089 = vmul.f32 %v1038, %v1038
  %v1090 = vmul.f32 %v1039, %v1039
  %v1091 = vmul.f32 %v1040, %v1040
  %v1092 = vmul.f32 %v1041, %v1041
  %v1093 = vadd.f32 %v1089, %v1090
  %v1094 = vadd.f32 %v1093, %v1091
  %v1095 = vadd.f32 %v1094, %v1092
  %v1096 = vrot.slane %v1095, 4
  %v1097 = vadd.f32 %v1095, %v1096
  %v1098 = vrot.slane %v1097, 2
  %v1099 = vadd.f32 %v1097, %v1098
  %v1100 = vrot.slane %v1099, 1
  %v1101 = vadd.f32 %v1099, %v1100
  %1102 = vmatpush.msra.mxu0 %v1068
  %1103 = vmatpush.msra.mxu0 %v1067
  %1104 = vmatpush.msra.mxu0 %v1066
  %1105 = vmatpush.msra.mxu0 %v1065
  %1106 = vmatpush.msra.mxu0 %v1064
  %1107 = vmatpush.msra.mxu0 %v1063
  %1108 = vmatpush.msra.mxu0 %v1062
  %1109 = vmatpush.msra.mxu0 %v1061
  %1110 = vmatpush.msra.mxu0 %v1060
  %1111 = vmatpush.msra.mxu0 %v1059
  %1112 = vmatpush.msra.mxu0 %v1058
  %1113 = vmatpush.msra.mxu0 %v1057
  %1114 = vmatpush.msra.mxu0 %v1056
  %1115 = vmatpush.msra.mxu0 %v1055
  %1116 = vmatpush.msra.mxu0 %v1054
  %1117 = vmatpush.msra.mxu0 %v1053
  %1118 = vmatmul.f32.gmra.mxu0 %v1101
  %v1119 = vpop.f32.mrf.mxu0
  %v1120 = vadd.f32 0.0, %v1119
  %1121 = vdwg.mxu0
  %v1122 = vmul.f32 %v1087, 0.001953125
  %v1123 = vmul.f32 %v1120, 0.001953125
  %v1124 = vmul.f32 %v1122, %v1122
  %v1125 = vsub.f32 %v1123, %v1124
  %v1126 = vadd.f32 %v1125, 1e-05
  %v1127 = vrsqrt.pop %v1126
  %v1128 = vmul.f32 %v1127, %v1126
  %v1129 = vmul.f32 %v1128, %v1127
  %v1130 = vmul.f32 0.5, %v1129
  %v1131 = vsub.f32 1.5, %v1130
  %v1132 = vmul.f32 %v1127, %v1131
  %vm1133 = vweird.f32 %v1126
  %vm1134 = vweird.f32 %v1127
  %vm1135 = vmor %vm1133, %vm1134
  %v1136 = vsel %vm1135, %v1127, %v1132
  %v1137 = vmul.f32 %v1042, %v1136
  %v1138 = vmul.f32 %v1122, %v1137
  %v1139 = vsub.f32 %v1043, %v1138
  %v1141 = vperm.slane %v1137, 0
  %v1143 = vmul.f32 %v1038, %v1141
  %v1144 = vmul.f32 %v1039, %v1141
  %v1145 = vmul.f32 %v1040, %v1141
  %v1146 = vmul.f32 %v1041, %v1141
  %v1148 = vperm.slane %v1139, 0
  %v1150 = vadd.f32 %v1143, %v1148
  %v1151 = vadd.f32 %v1144, %v1148
  %v1152 = vadd.f32 %v1145, %v1148
  %v1153 = vadd.f32 %v1146, %v1148
  %1154 = vst [vmem:[%s10] sm:$0xff] %v1150
  %1155 = vst [vmem:[%s10 + $0x8] sm:$0xff] %v1151
  %1156 = vst [vmem:[%s10 + $0x10] sm:$0xff] %v1152
  %1157 = vst [vmem:[%s10 + $0x18] sm:$0xff] %v1153
  // Predicated region
  $region42: #{_lambda_.1} parent=0 // pred_check
    _
  $region43: #{_lambda_.1} parent=0 // pred_check_branch
    %1159 = sbr.rel (0) target = $region45
  $region44: #{_lambda_.1} parent=0 // pred_region
    _
  $region45: #{_lambda_.1} parent=0 // pred_fallthru
    _
  // Predicated region
  $region46: #{_lambda_.1} parent=0 // pred_check
    _
  $region47: #{_lambda_.1} parent=0 // pred_check_branch
    %1161 = sbr.rel (0) target = $region49
  $region48: #{_lambda_.1} parent=0 // pred_region
    _
  $region49: #{_lambda_.1} parent=0 // pred_fallthru
    _

</llo_original>
